<compile_context>
chip_gen: v7x
topology: tpu7x:2x2x1
jax: 0.10.0
libtpu: 0.0.40
codegen_flags: <defaults>
</compile_context>

<pallas_src>
import functools
import numpy as np
import jax
import jax.numpy as jnp
from jax.experimental import pallas as pl
from jax.experimental.pallas import tpu as pltpu


def _layernorm(x, gamma, beta, eps=1e-5):
    # LayerNorm over the last dim (PyTorch default eps=1e-5), f32 math.
    mean = jnp.mean(x, axis=-1, keepdims=True)
    var = jnp.mean((x - mean) ** 2, axis=-1, keepdims=True)
    return (x - mean) * jax.lax.rsqrt(var + eps) * gamma + beta


def decoder_stack_kernel(pad_ref, x_ref,
                         wq_ref, wk_ref, wv_ref, wo_ref,
                         ln1g_ref, ln1b_ref,
                         w1_ref, b1_ref, w2_ref, b2_ref,
                         ln2g_ref, ln2b_ref,
                         out_ref, attn_ref,
                         act_ref,
                         *, num_heads, key_size, value_size):
    """Grid point = (batch element b, layer l). Activation lives in act_ref."""
    l = pl.program_id(1)
    S = act_ref.shape[0]

    # Layer 0: load the embedded input into the resident activation scratch.
    @pl.when(l == 0)
    def _():
        act_ref[...] = x_ref[0]

    x = act_ref[...]                                  # [S, H] f32
    xb = x.astype(jnp.bfloat16)

    # --- additive attention bias (causal + key padding), built in-kernel ---
    row = jax.lax.broadcasted_iota(jnp.int32, (S, S), 0)
    col = jax.lax.broadcasted_iota(jnp.int32, (S, S), 1)
    pad = pad_ref[0]                                  # [1, S], 1.0 where key is pad
    masked = jnp.logical_or(col > row, pad > 0.5)     # [S, S] bool
    neg_bias = jnp.where(masked, jnp.float32(-1e9), jnp.float32(0.0))

    # --- multi-head attention ---
    scale = jnp.float32(1.0 / np.sqrt(key_size))
    q = jnp.dot(xb, wq_ref[0], preferred_element_type=jnp.float32) * scale
    k = jnp.dot(xb, wk_ref[0], preferred_element_type=jnp.float32)
    v = jnp.dot(xb, wv_ref[0], preferred_element_type=jnp.float32)
    qb = q.astype(jnp.bfloat16)
    kb = k.astype(jnp.bfloat16)
    vb = v.astype(jnp.bfloat16)

    head_outs = []
    attn_ws = []
    for h in range(num_heads):                        # static unroll over heads
        qh = qb[:, h * key_size:(h + 1) * key_size]   # [S, dk] bf16
        kh = kb[:, h * key_size:(h + 1) * key_size]   # [S, dk] bf16
        vh = vb[:, h * value_size:(h + 1) * value_size]  # [S, dv] bf16

        scores = jnp.dot(qh, kh.T, preferred_element_type=jnp.float32) + neg_bias
        m = jnp.max(scores, axis=-1, keepdims=True)
        e = jnp.exp(scores - m)
        w = e * pl.reciprocal(jnp.sum(e, axis=-1, keepdims=True), approx=True)
        attn_ws.append(w)
        head_outs.append(jnp.dot(w.astype(jnp.bfloat16), vh,
                                 preferred_element_type=jnp.float32))

    # attention weights: one store per (layer, batch) as a [nh*S, S] slab
    attn_ref[0, 0] = jnp.concatenate(attn_ws, axis=0)

    # single output projection over concatenated heads: [S, nh*dv] @ [nh*dv, H]
    concat = jnp.concatenate(head_outs, axis=-1).astype(jnp.bfloat16)
    attn_out = jnp.dot(concat, wo_ref[0], preferred_element_type=jnp.float32)
    y = _layernorm(attn_out + x, ln1g_ref[0], ln1b_ref[0])     # residual + LN (f32)

    # --- position-wise FFN ---
    h1 = jnp.maximum(
        jnp.dot(y.astype(jnp.bfloat16), w1_ref[0],
                preferred_element_type=jnp.float32) + b1_ref[0], 0.0)
    h2 = jnp.dot(h1.astype(jnp.bfloat16), w2_ref[0],
                 preferred_element_type=jnp.float32) + b2_ref[0]
    new_x = _layernorm(h2 + y, ln2g_ref[0], ln2b_ref[0])

    act_ref[...] = new_x                              # stays resident for layer l+1

    @pl.when(l == pl.num_programs(1) - 1)
    def _():
        out_ref[0] = new_x


def decoder_stack(x, pad, sp, *, num_heads, key_size, value_size):
    """Run the whole decoder stack in one pallas_call. sp = stacked params."""
    B, S, H = x.shape
    L = sp["wq"].shape[0]
    F = sp["w1"].shape[2]
    nh, dk, dv = num_heads, key_size, value_size

    kernel = functools.partial(decoder_stack_kernel, num_heads=nh,
                               key_size=dk, value_size=dv)
    wmap = lambda b, l: (l, 0, 0)   # per-layer weight slice
    bmap = lambda b, l: (b, 0, 0)   # per-batch activation slice

    out, attn = pl.pallas_call(
        kernel,
        out_shape=(jax.ShapeDtypeStruct((B, S, H), jnp.float32),
                   jax.ShapeDtypeStruct((L, B, nh * S, S), jnp.float32)),
        grid=(B, L),
        in_specs=[
            pl.BlockSpec((1, 1, S), bmap),            # pad      [B,1,S]   f32
            pl.BlockSpec((1, S, H), bmap),            # x        [B,S,H]   f32
            pl.BlockSpec((1, H, nh * dk), wmap),      # Wq       bf16
            pl.BlockSpec((1, H, nh * dk), wmap),      # Wk       bf16
            pl.BlockSpec((1, H, nh * dv), wmap),      # Wv       bf16
            pl.BlockSpec((1, nh * dv, H), wmap),      # Wo       bf16
            pl.BlockSpec((1, 1, H), wmap),            # ln1 gamma f32
            pl.BlockSpec((1, 1, H), wmap),            # ln1 beta  f32
            pl.BlockSpec((1, H, F), wmap),            # dense1 W  bf16
            pl.BlockSpec((1, 1, F), wmap),            # dense1 b  f32
            pl.BlockSpec((1, F, H), wmap),            # dense2 W  bf16
            pl.BlockSpec((1, 1, H), wmap),            # dense2 b  f32
            pl.BlockSpec((1, 1, H), wmap),            # ln2 gamma f32
            pl.BlockSpec((1, 1, H), wmap),            # ln2 beta  f32
        ],
        out_specs=(pl.BlockSpec((1, S, H), bmap),
                   pl.BlockSpec((1, 1, nh * S, S), lambda b, l: (l, b, 0, 0))),
        scratch_shapes=[pltpu.VMEM((S, H), jnp.float32)],   # resident activation
        compiler_params=pltpu.CompilerParams(
            dimension_semantics=("parallel", "arbitrary"),
            vmem_limit_bytes=32 * 1024 * 1024),
    )(pad, x,
      sp["wq"], sp["wk"], sp["wv"], sp["wo"],
      sp["ln1g"], sp["ln1b"],
      sp["w1"], sp["b1"], sp["w2"], sp["b2"],
      sp["ln2g"], sp["ln2b"])

    attn = attn.reshape(L, B, nh, S, S)
    return out, [attn[i] for i in range(L)]


# ---------------- glue: embedding, positional encoding, masks, params --------

def make_positional_encoding(max_len, num_hiddens):
    P = np.zeros((1, max_len, num_hiddens), dtype=np.float32)
    pos = np.arange(max_len, dtype=np.float32).reshape(-1, 1)
    div = np.power(10000.0, np.arange(0, num_hiddens, 2, dtype=np.float32)
                   / num_hiddens)
    X = pos / div
    P[:, :, 0::2] = np.sin(X)
    P[:, :, 1::2] = np.cos(X)
    return jnp.asarray(P)


def build_pad_vector(tokens, attention_mask, pad_label=0):
    """[B,1,S] float, 1.0 where the KEY position is padding."""
    B, S = tokens.shape
    if attention_mask is None:
        return jnp.zeros((B, 1, S), jnp.float32)
    return (attention_mask == pad_label).astype(jnp.float32).reshape(B, 1, S)


def init_params(key, *, num_hiddens, num_heads, ffn_hiddens, key_size,
                value_size, vocab_size, num_layers):
    keys = jax.random.split(key, 1 + num_layers)
    embedding = jax.random.normal(keys[0], (vocab_size, num_hiddens),
                                  jnp.float32) * 0.05
    layers = []
    for l in range(num_layers):
        ks = jax.random.split(keys[1 + l], 8)
        s = 1.0 / np.sqrt(num_hiddens)
        sf = 1.0 / np.sqrt(ffn_hiddens)
        layers.append({
            "wq": jax.random.uniform(ks[0], (num_hiddens, num_heads * key_size),
                                     jnp.float32, -s, s),
            "wk": jax.random.uniform(ks[1], (num_hiddens, num_heads * key_size),
                                     jnp.float32, -s, s),
            "wv": jax.random.uniform(ks[2], (num_hiddens, num_heads * value_size),
                                     jnp.float32, -s, s),
            "wo": jax.random.uniform(ks[3], (num_heads * value_size, num_hiddens),
                                     jnp.float32, -s, s),
            "ln1g": jnp.ones((1, num_hiddens), jnp.float32),
            "ln1b": jnp.zeros((1, num_hiddens), jnp.float32),
            "w1": jax.random.uniform(ks[4], (num_hiddens, ffn_hiddens),
                                     jnp.float32, -s, s),
            "b1": jax.random.uniform(ks[5], (1, ffn_hiddens), jnp.float32, -s, s),
            "w2": jax.random.uniform(ks[6], (ffn_hiddens, num_hiddens),
                                     jnp.float32, -sf, sf),
            "b2": jax.random.uniform(ks[7], (1, num_hiddens), jnp.float32, -sf, sf),
            "ln2g": jnp.ones((1, num_hiddens), jnp.float32),
            "ln2b": jnp.zeros((1, num_hiddens), jnp.float32),
        })
    return {"embedding": embedding, "layers": layers}


def stack_layer_params(layers):
    """Stack per-layer params with a leading layer axis; matmul weights -> bf16."""
    def stk(name, dtype=None):
        arr = jnp.stack([p[name] for p in layers], axis=0)
        return arr.astype(dtype) if dtype is not None else arr
    return {
        "wq": stk("wq", jnp.bfloat16), "wk": stk("wk", jnp.bfloat16),
        "wv": stk("wv", jnp.bfloat16), "wo": stk("wo", jnp.bfloat16),
        "w1": stk("w1", jnp.bfloat16), "w2": stk("w2", jnp.bfloat16),
        "b1": stk("b1"), "b2": stk("b2"),
        "ln1g": stk("ln1g"), "ln1b": stk("ln1b"),
        "ln2g": stk("ln2g"), "ln2b": stk("ln2b"),
    }


def decoder_forward(tokens, attention_mask, params, pos_table, *,
                    num_heads, key_size, value_size):
    # embedding lookup + positional encoding (glue, plain JAX)
    out = params["embedding"][tokens]                      # [B, S, H]
    S = tokens.shape[1]
    out = out + pos_table[:, :S, :]
    pad = build_pad_vector(tokens, attention_mask)         # [B, 1, S]
    stacked = stack_layer_params(params["layers"])
    out, self_attention_weights = decoder_stack(
        out, pad, stacked, num_heads=num_heads,
        key_size=key_size, value_size=value_size)
    return out, self_attention_weights


if __name__ == "__main__":
    # Small config consistent with the module.
    B, S = 2, 8
    num_hiddens = 32
    num_heads = 4
    key_size = value_size = 8
    ffn_hiddens = 64
    vocab_size = 50
    max_position = 16
    num_layers = 2

    root = jax.random.PRNGKey(0)
    k_tok, k_param = jax.random.split(root)

    tokens = jax.random.randint(k_tok, (B, S), 1, vocab_size, jnp.int32)
    # pad the tail of the second sequence
    tokens = tokens.at[1, 6:].set(0)
    attention_mask = (tokens != 0).astype(jnp.int32)        # [B, S]

    params = init_params(k_param, num_hiddens=num_hiddens, num_heads=num_heads,
                         ffn_hiddens=ffn_hiddens, key_size=key_size,
                         value_size=value_size, vocab_size=vocab_size,
                         num_layers=num_layers)
    pos_table = make_positional_encoding(max_position, num_hiddens)

    out, attn_ws = decoder_forward(tokens, attention_mask, params, pos_table,
                                   num_heads=num_heads, key_size=key_size,
                                   value_size=value_size)
    out = jax.block_until_ready(out)
    attn_ws = [jax.block_until_ready(a) for a in attn_ws]

    assert out.shape == (B, S, num_hiddens)
    assert len(attn_ws) == num_layers
    assert all(a.shape == (B, num_heads, S, S) for a in attn_ws)
    assert bool(jnp.all(jnp.isfinite(out)))
    assert all(bool(jnp.all(jnp.isfinite(a))) for a in attn_ws)
    print("KERNEL_OK")
</pallas_src>

<mosaic_0001>
module attributes {stable_mosaic.version = 11 : i64} {
  func.func @decoder_stack_kernel(%arg0: i32, %arg1: i32, %arg2: memref<1x1x8xf32, #tpu.memory_space<vmem>>, %arg3: memref<1x8x32xf32, #tpu.memory_space<vmem>>, %arg4: memref<1x32x32xbf16, #tpu.memory_space<vmem>>, %arg5: memref<1x32x32xbf16, #tpu.memory_space<vmem>>, %arg6: memref<1x32x32xbf16, #tpu.memory_space<vmem>>, %arg7: memref<1x32x32xbf16, #tpu.memory_space<vmem>>, %arg8: memref<1x1x32xf32, #tpu.memory_space<vmem>>, %arg9: memref<1x1x32xf32, #tpu.memory_space<vmem>>, %arg10: memref<1x32x64xbf16, #tpu.memory_space<vmem>>, %arg11: memref<1x1x64xf32, #tpu.memory_space<vmem>>, %arg12: memref<1x64x32xbf16, #tpu.memory_space<vmem>>, %arg13: memref<1x1x32xf32, #tpu.memory_space<vmem>>, %arg14: memref<1x1x32xf32, #tpu.memory_space<vmem>>, %arg15: memref<1x1x32xf32, #tpu.memory_space<vmem>>, %arg16: memref<1x8x32xf32, #tpu.memory_space<vmem>>, %arg17: memref<1x1x32x8xf32, #tpu.memory_space<vmem>>, %arg18: memref<8x32xf32, #tpu.memory_space<vmem>>) attributes {dimension_semantics = [#tpu.dimension_semantics<parallel>, #tpu.dimension_semantics<arbitrary>], iteration_bounds = array<i64: 2, 2>, scalar_prefetch = 0 : i64, scratch_operands = 1 : i64, tpu.core_type = #tpu.core_type<tc>, window_params = [{transform_indices = @transform_0, window_bounds = array<i64: 1, 1, 8>}, {transform_indices = @transform_1, window_bounds = array<i64: 1, 8, 32>}, {transform_indices = @transform_2, window_bounds = array<i64: 1, 32, 32>}, {transform_indices = @transform_3, window_bounds = array<i64: 1, 32, 32>}, {transform_indices = @transform_4, window_bounds = array<i64: 1, 32, 32>}, {transform_indices = @transform_5, window_bounds = array<i64: 1, 32, 32>}, {transform_indices = @transform_6, window_bounds = array<i64: 1, 1, 32>}, {transform_indices = @transform_7, window_bounds = array<i64: 1, 1, 32>}, {transform_indices = @transform_8, window_bounds = array<i64: 1, 32, 64>}, {transform_indices = @transform_9, window_bounds = array<i64: 1, 1, 64>}, {transform_indices = @transform_10, window_bounds = array<i64: 1, 64, 32>}, {transform_indices = @transform_11, window_bounds = array<i64: 1, 1, 32>}, {transform_indices = @transform_12, window_bounds = array<i64: 1, 1, 32>}, {transform_indices = @transform_13, window_bounds = array<i64: 1, 1, 32>}, {transform_indices = @transform_14, window_bounds = array<i64: 1, 8, 32>}, {transform_indices = @transform_15, window_bounds = array<i64: 1, 1, 32, 8>}]} {
    %c0_i32 = arith.constant 0 : i32
    %0 = arith.cmpi eq, %arg1, %c0_i32 : i32
    %1 = arith.extui %0 : i1 to i32
    %c0_i32_0 = arith.constant 0 : i32
    %2 = arith.cmpi ne, %1, %c0_i32_0 : i32
    scf.if %2 {
      %c0_84 = arith.constant 0 : index
      %c0_85 = arith.constant 0 : index
      %c0_86 = arith.constant 0 : index
      %188 = vector.load %arg3[%c0_84, %c0_85, %c0_86] : memref<1x8x32xf32, #tpu.memory_space<vmem>>, vector<1x8x32xf32>
      %189 = vector.shape_cast %188 : vector<1x8x32xf32> to vector<8x32xf32>
      %c0_87 = arith.constant 0 : index
      %c0_88 = arith.constant 0 : index
      %190 = vector.load %arg18[%c0_87, %c0_88] : memref<8x32xf32, #tpu.memory_space<vmem>>, vector<8x32xf32>
      tpu.vector_store %arg18[%c0_87, %c0_88], %189 {strides = array<i32>} : memref<8x32xf32, #tpu.memory_space<vmem>>, vector<8x32xf32>,
    } else {
    }
    %c0 = arith.constant 0 : index
    %c0_1 = arith.constant 0 : index
    %3 = vector.load %arg18[%c0, %c0_1] : memref<8x32xf32, #tpu.memory_space<vmem>>, vector<8x32xf32>
    %4 = arith.truncf %3 : vector<8x32xf32> to vector<8x32xbf16>
    %5 = tpu.iota {dimensions = array<i32: 0>} : vector<8x8xi32>
    %6 = tpu.iota {dimensions = array<i32: 1>} : vector<8x8xi32>
    %c0_2 = arith.constant 0 : index
    %c0_3 = arith.constant 0 : index
    %c0_4 = arith.constant 0 : index
    %7 = vector.load %arg2[%c0_2, %c0_3, %c0_4] : memref<1x1x8xf32, #tpu.memory_space<vmem>>, vector<1x1x8xf32>
    %8 = vector.shape_cast %7 : vector<1x1x8xf32> to vector<1x8xf32>
    %9 = arith.cmpi sgt, %6, %5 : vector<8x8xi32>
    %cst = arith.constant 5.000000e-01 : f32
    %10 = vector.broadcast %cst : f32 to vector<1x8xf32>
    %11 = arith.cmpf ogt, %8, %10 : vector<1x8xf32>
    %12 = vector.broadcast %11 : vector<1x8xi1> to vector<8x8xi1>
    %13 = arith.ori %9, %12 : vector<8x8xi1>
    %cst_5 = arith.constant -1.000000e+09 : f32
    %cst_6 = arith.constant 0.000000e+00 : f32
    %14 = vector.broadcast %cst_5 : f32 to vector<8x8xf32>
    %15 = vector.broadcast %cst_6 : f32 to vector<8x8xf32>
    %16 = arith.select %13, %14, %15 : vector<8x8xi1>, vector<8x8xf32>
    %c0_7 = arith.constant 0 : index
    %c0_8 = arith.constant 0 : index
    %c0_9 = arith.constant 0 : index
    %17 = vector.load %arg4[%c0_7, %c0_8, %c0_9] : memref<1x32x32xbf16, #tpu.memory_space<vmem>>, vector<1x32x32xbf16>
    %18 = vector.shape_cast %17 : vector<1x32x32xbf16> to vector<32x32xbf16>
    %cst_10 = arith.constant dense<0.000000e+00> : vector<8x32xf32>
    %19 = tpu.matmul %4, %18, %cst_10 {dimension_numbers = #tpu.dot_dimension_numbers<[1], [0], [0], [1], [0, 0, 1, 1], [], []>} : vector<8x32xbf16>, vector<32x32xbf16>, vector<8x32xf32> -> vector<8x32xf32>
    %cst_11 = arith.constant 0.353553385 : f32
    %20 = vector.broadcast %cst_11 : f32 to vector<8x32xf32>
    %21 = arith.mulf %19, %20 : vector<8x32xf32>
    %c0_12 = arith.constant 0 : index
    %c0_13 = arith.constant 0 : index
    %c0_14 = arith.constant 0 : index
    %22 = vector.load %arg5[%c0_12, %c0_13, %c0_14] : memref<1x32x32xbf16, #tpu.memory_space<vmem>>, vector<1x32x32xbf16>
    %23 = vector.shape_cast %22 : vector<1x32x32xbf16> to vector<32x32xbf16>
    %cst_15 = arith.constant dense<0.000000e+00> : vector<8x32xf32>
    %24 = tpu.matmul %4, %23, %cst_15 {dimension_numbers = #tpu.dot_dimension_numbers<[1], [0], [0], [1], [0, 0, 1, 1], [], []>} : vector<8x32xbf16>, vector<32x32xbf16>, vector<8x32xf32> -> vector<8x32xf32>
    %c0_16 = arith.constant 0 : index
    %c0_17 = arith.constant 0 : index
    %c0_18 = arith.constant 0 : index
    %25 = vector.load %arg6[%c0_16, %c0_17, %c0_18] : memref<1x32x32xbf16, #tpu.memory_space<vmem>>, vector<1x32x32xbf16>
    %26 = vector.shape_cast %25 : vector<1x32x32xbf16> to vector<32x32xbf16>
    %cst_19 = arith.constant dense<0.000000e+00> : vector<8x32xf32>
    %27 = tpu.matmul %4, %26, %cst_19 {dimension_numbers = #tpu.dot_dimension_numbers<[1], [0], [0], [1], [0, 0, 1, 1], [], []>} : vector<8x32xbf16>, vector<32x32xbf16>, vector<8x32xf32> -> vector<8x32xf32>
    %28 = arith.truncf %21 : vector<8x32xf32> to vector<8x32xbf16>
    %29 = arith.truncf %24 : vector<8x32xf32> to vector<8x32xbf16>
    %30 = arith.truncf %27 : vector<8x32xf32> to vector<8x32xbf16>
    %31 = vector.extract_strided_slice %28 {offsets = [0, 0], sizes = [8, 8], strides = [1, 1]} : vector<8x32xbf16> to vector<8x8xbf16>
    %32 = vector.extract_strided_slice %29 {offsets = [0, 0], sizes = [8, 8], strides = [1, 1]} : vector<8x32xbf16> to vector<8x8xbf16>
    %33 = vector.extract_strided_slice %30 {offsets = [0, 0], sizes = [8, 8], strides = [1, 1]} : vector<8x32xbf16> to vector<8x8xbf16>
    %34 = tpu.transpose %32, [1, 0] : vector<8x8xbf16> -> vector<8x8xbf16>
    %cst_20 = arith.constant dense<0.000000e+00> : vector<8x8xf32>
    %35 = tpu.matmul %31, %34, %cst_20 {dimension_numbers = #tpu.dot_dimension_numbers<[1], [0], [0], [1], [0, 0, 1, 1], [], []>} : vector<8x8xbf16>, vector<8x8xbf16>, vector<8x8xf32> -> vector<8x8xf32>
    %36 = arith.addf %35, %16 : vector<8x8xf32>
    %cst_21 = arith.constant dense<0xFF800000> : vector<8xf32>
    %37 = vector.multi_reduction <maximumf>, %36, %cst_21 [1] : vector<8x8xf32> to vector<8xf32>
    %38 = vector.shape_cast %37 : vector<8xf32> to vector<8x1xf32>
    %39 = vector.broadcast %38 : vector<8x1xf32> to vector<8x8xf32>
    %40 = arith.subf %36, %39 : vector<8x8xf32>
    %41 = math.exp %40 : vector<8x8xf32>
    %cst_22 = arith.constant dense<0.000000e+00> : vector<8xf32>
    %42 = vector.multi_reduction <add>, %41, %cst_22 [1] : vector<8x8xf32> to vector<8xf32>
    %43 = vector.shape_cast %42 : vector<8xf32> to vector<8x1xf32>
    %44 = tpu.reciprocal %43 {approx = true} : vector<8x1xf32> -> vector<8x1xf32>
    %45 = vector.broadcast %44 : vector<8x1xf32> to vector<8x8xf32>
    %46 = arith.mulf %41, %45 : vector<8x8xf32>
    %47 = arith.truncf %46 : vector<8x8xf32> to vector<8x8xbf16>
    %cst_23 = arith.constant dense<0.000000e+00> : vector<8x8xf32>
    %48 = tpu.matmul %47, %33, %cst_23 {dimension_numbers = #tpu.dot_dimension_numbers<[1], [0], [0], [1], [0, 0, 1, 1], [], []>} : vector<8x8xbf16>, vector<8x8xbf16>, vector<8x8xf32> -> vector<8x8xf32>
    %49 = vector.extract_strided_slice %28 {offsets = [0, 8], sizes = [8, 8], strides = [1, 1]} : vector<8x32xbf16> to vector<8x8xbf16>
    %50 = vector.extract_strided_slice %29 {offsets = [0, 8], sizes = [8, 8], strides = [1, 1]} : vector<8x32xbf16> to vector<8x8xbf16>
    %51 = vector.extract_strided_slice %30 {offsets = [0, 8], sizes = [8, 8], strides = [1, 1]} : vector<8x32xbf16> to vector<8x8xbf16>
    %52 = tpu.transpose %50, [1, 0] : vector<8x8xbf16> -> vector<8x8xbf16>
    %cst_24 = arith.constant dense<0.000000e+00> : vector<8x8xf32>
    %53 = tpu.matmul %49, %52, %cst_24 {dimension_numbers = #tpu.dot_dimension_numbers<[1], [0], [0], [1], [0, 0, 1, 1], [], []>} : vector<8x8xbf16>, vector<8x8xbf16>, vector<8x8xf32> -> vector<8x8xf32>
    %54 = arith.addf %53, %16 : vector<8x8xf32>
    %cst_25 = arith.constant dense<0xFF800000> : vector<8xf32>
    %55 = vector.multi_reduction <maximumf>, %54, %cst_25 [1] : vector<8x8xf32> to vector<8xf32>
    %56 = vector.shape_cast %55 : vector<8xf32> to vector<8x1xf32>
    %57 = vector.broadcast %56 : vector<8x1xf32> to vector<8x8xf32>
    %58 = arith.subf %54, %57 : vector<8x8xf32>
    %59 = math.exp %58 : vector<8x8xf32>
    %cst_26 = arith.constant dense<0.000000e+00> : vector<8xf32>
    %60 = vector.multi_reduction <add>, %59, %cst_26 [1] : vector<8x8xf32> to vector<8xf32>
    %61 = vector.shape_cast %60 : vector<8xf32> to vector<8x1xf32>
    %62 = tpu.reciprocal %61 {approx = true} : vector<8x1xf32> -> vector<8x1xf32>
    %63 = vector.broadcast %62 : vector<8x1xf32> to vector<8x8xf32>
    %64 = arith.mulf %59, %63 : vector<8x8xf32>
    %65 = arith.truncf %64 : vector<8x8xf32> to vector<8x8xbf16>
    %cst_27 = arith.constant dense<0.000000e+00> : vector<8x8xf32>
    %66 = tpu.matmul %65, %51, %cst_27 {dimension_numbers = #tpu.dot_dimension_numbers<[1], [0], [0], [1], [0, 0, 1, 1], [], []>} : vector<8x8xbf16>, vector<8x8xbf16>, vector<8x8xf32> -> vector<8x8xf32>
    %67 = vector.extract_strided_slice %28 {offsets = [0, 16], sizes = [8, 8], strides = [1, 1]} : vector<8x32xbf16> to vector<8x8xbf16>
    %68 = vector.extract_strided_slice %29 {offsets = [0, 16], sizes = [8, 8], strides = [1, 1]} : vector<8x32xbf16> to vector<8x8xbf16>
    %69 = vector.extract_strided_slice %30 {offsets = [0, 16], sizes = [8, 8], strides = [1, 1]} : vector<8x32xbf16> to vector<8x8xbf16>
    %70 = tpu.transpose %68, [1, 0] : vector<8x8xbf16> -> vector<8x8xbf16>
    %cst_28 = arith.constant dense<0.000000e+00> : vector<8x8xf32>
    %71 = tpu.matmul %67, %70, %cst_28 {dimension_numbers = #tpu.dot_dimension_numbers<[1], [0], [0], [1], [0, 0, 1, 1], [], []>} : vector<8x8xbf16>, vector<8x8xbf16>, vector<8x8xf32> -> vector<8x8xf32>
    %72 = arith.addf %71, %16 : vector<8x8xf32>
    %cst_29 = arith.constant dense<0xFF800000> : vector<8xf32>
    %73 = vector.multi_reduction <maximumf>, %72, %cst_29 [1] : vector<8x8xf32> to vector<8xf32>
    %74 = vector.shape_cast %73 : vector<8xf32> to vector<8x1xf32>
    %75 = vector.broadcast %74 : vector<8x1xf32> to vector<8x8xf32>
    %76 = arith.subf %72, %75 : vector<8x8xf32>
    %77 = math.exp %76 : vector<8x8xf32>
    %cst_30 = arith.constant dense<0.000000e+00> : vector<8xf32>
    %78 = vector.multi_reduction <add>, %77, %cst_30 [1] : vector<8x8xf32> to vector<8xf32>
    %79 = vector.shape_cast %78 : vector<8xf32> to vector<8x1xf32>
    %80 = tpu.reciprocal %79 {approx = true} : vector<8x1xf32> -> vector<8x1xf32>
    %81 = vector.broadcast %80 : vector<8x1xf32> to vector<8x8xf32>
    %82 = arith.mulf %77, %81 : vector<8x8xf32>
    %83 = arith.truncf %82 : vector<8x8xf32> to vector<8x8xbf16>
    %cst_31 = arith.constant dense<0.000000e+00> : vector<8x8xf32>
    %84 = tpu.matmul %83, %69, %cst_31 {dimension_numbers = #tpu.dot_dimension_numbers<[1], [0], [0], [1], [0, 0, 1, 1], [], []>} : vector<8x8xbf16>, vector<8x8xbf16>, vector<8x8xf32> -> vector<8x8xf32>
    %85 = vector.extract_strided_slice %28 {offsets = [0, 24], sizes = [8, 8], strides = [1, 1]} : vector<8x32xbf16> to vector<8x8xbf16>
    %86 = vector.extract_strided_slice %29 {offsets = [0, 24], sizes = [8, 8], strides = [1, 1]} : vector<8x32xbf16> to vector<8x8xbf16>
    %87 = vector.extract_strided_slice %30 {offsets = [0, 24], sizes = [8, 8], strides = [1, 1]} : vector<8x32xbf16> to vector<8x8xbf16>
    %88 = tpu.transpose %86, [1, 0] : vector<8x8xbf16> -> vector<8x8xbf16>
    %cst_32 = arith.constant dense<0.000000e+00> : vector<8x8xf32>
    %89 = tpu.matmul %85, %88, %cst_32 {dimension_numbers = #tpu.dot_dimension_numbers<[1], [0], [0], [1], [0, 0, 1, 1], [], []>} : vector<8x8xbf16>, vector<8x8xbf16>, vector<8x8xf32> -> vector<8x8xf32>
    %90 = arith.addf %89, %16 : vector<8x8xf32>
    %cst_33 = arith.constant dense<0xFF800000> : vector<8xf32>
    %91 = vector.multi_reduction <maximumf>, %90, %cst_33 [1] : vector<8x8xf32> to vector<8xf32>
    %92 = vector.shape_cast %91 : vector<8xf32> to vector<8x1xf32>
    %93 = vector.broadcast %92 : vector<8x1xf32> to vector<8x8xf32>
    %94 = arith.subf %90, %93 : vector<8x8xf32>
    %95 = math.exp %94 : vector<8x8xf32>
    %cst_34 = arith.constant dense<0.000000e+00> : vector<8xf32>
    %96 = vector.multi_reduction <add>, %95, %cst_34 [1] : vector<8x8xf32> to vector<8xf32>
    %97 = vector.shape_cast %96 : vector<8xf32> to vector<8x1xf32>
    %98 = tpu.reciprocal %97 {approx = true} : vector<8x1xf32> -> vector<8x1xf32>
    %99 = vector.broadcast %98 : vector<8x1xf32> to vector<8x8xf32>
    %100 = arith.mulf %95, %99 : vector<8x8xf32>
    %101 = arith.truncf %100 : vector<8x8xf32> to vector<8x8xbf16>
    %cst_35 = arith.constant dense<0.000000e+00> : vector<8x8xf32>
    %102 = tpu.matmul %101, %87, %cst_35 {dimension_numbers = #tpu.dot_dimension_numbers<[1], [0], [0], [1], [0, 0, 1, 1], [], []>} : vector<8x8xbf16>, vector<8x8xbf16>, vector<8x8xf32> -> vector<8x8xf32>
    %103 = tpu.concatenate %46, %64, %82, %100 in 0 : vector<8x8xf32>, vector<8x8xf32>, vector<8x8xf32>, vector<8x8xf32> -> vector<32x8xf32>
    %c0_36 = arith.constant 0 : index
    %c0_37 = arith.constant 0 : index
    %c0_38 = arith.constant 0 : index
    %c0_39 = arith.constant 0 : index
    %104 = vector.load %arg17[%c0_36, %c0_37, %c0_38, %c0_39] : memref<1x1x32x8xf32, #tpu.memory_space<vmem>>, vector<1x1x32x8xf32>
    %105 = vector.shape_cast %104 : vector<1x1x32x8xf32> to vector<32x8xf32>
    %106 = vector.shape_cast %103 : vector<32x8xf32> to vector<1x1x32x8xf32>
    tpu.vector_store %arg17[%c0_36, %c0_37, %c0_38, %c0_39], %106 {strides = array<i32>} : memref<1x1x32x8xf32, #tpu.memory_space<vmem>>, vector<1x1x32x8xf32>,
    %107 = tpu.concatenate %48, %66, %84, %102 in 1 : vector<8x8xf32>, vector<8x8xf32>, vector<8x8xf32>, vector<8x8xf32> -> vector<8x32xf32>
    %108 = arith.truncf %107 : vector<8x32xf32> to vector<8x32xbf16>
    %c0_40 = arith.constant 0 : index
    %c0_41 = arith.constant 0 : index
    %c0_42 = arith.constant 0 : index
    %109 = vector.load %arg7[%c0_40, %c0_41, %c0_42] : memref<1x32x32xbf16, #tpu.memory_space<vmem>>, vector<1x32x32xbf16>
    %110 = vector.shape_cast %109 : vector<1x32x32xbf16> to vector<32x32xbf16>
    %cst_43 = arith.constant dense<0.000000e+00> : vector<8x32xf32>
    %111 = tpu.matmul %108, %110, %cst_43 {dimension_numbers = #tpu.dot_dimension_numbers<[1], [0], [0], [1], [0, 0, 1, 1], [], []>} : vector<8x32xbf16>, vector<32x32xbf16>, vector<8x32xf32> -> vector<8x32xf32>
    %112 = arith.addf %111, %3 : vector<8x32xf32>
    %c0_44 = arith.constant 0 : index
    %c0_45 = arith.constant 0 : index
    %c0_46 = arith.constant 0 : index
    %113 = vector.load %arg8[%c0_44, %c0_45, %c0_46] : memref<1x1x32xf32, #tpu.memory_space<vmem>>, vector<1x1x32xf32>
    %114 = vector.shape_cast %113 : vector<1x1x32xf32> to vector<1x32xf32>
    %c0_47 = arith.constant 0 : index
    %c0_48 = arith.constant 0 : index
    %c0_49 = arith.constant 0 : index
    %115 = vector.load %arg9[%c0_47, %c0_48, %c0_49] : memref<1x1x32xf32, #tpu.memory_space<vmem>>, vector<1x1x32xf32>
    %116 = vector.shape_cast %115 : vector<1x1x32xf32> to vector<1x32xf32>
    %cst_50 = arith.constant dense<0.000000e+00> : vector<8xf32>
    %117 = vector.multi_reduction <add>, %112, %cst_50 [1] : vector<8x32xf32> to vector<8xf32>
    %118 = vector.shape_cast %117 : vector<8xf32> to vector<8x1xf32>
    %cst_51 = arith.constant 3.200000e+01 : f32
    %119 = vector.broadcast %cst_51 : f32 to vector<8x1xf32>
    %120 = arith.divf %118, %119 : vector<8x1xf32>
    %121 = vector.broadcast %120 : vector<8x1xf32> to vector<8x32xf32>
    %122 = arith.subf %112, %121 : vector<8x32xf32>
    %123 = arith.mulf %122, %122 : vector<8x32xf32>
    %cst_52 = arith.constant dense<0.000000e+00> : vector<8xf32>
    %124 = vector.multi_reduction <add>, %123, %cst_52 [1] : vector<8x32xf32> to vector<8xf32>
    %125 = vector.shape_cast %124 : vector<8xf32> to vector<8x1xf32>
    %cst_53 = arith.constant 3.200000e+01 : f32
    %126 = vector.broadcast %cst_53 : f32 to vector<8x1xf32>
    %127 = arith.divf %125, %126 : vector<8x1xf32>
    %128 = vector.broadcast %120 : vector<8x1xf32> to vector<8x32xf32>
    %129 = arith.subf %112, %128 : vector<8x32xf32>
    %cst_54 = arith.constant 9.99999974E-6 : f32
    %130 = vector.broadcast %cst_54 : f32 to vector<8x1xf32>
    %131 = arith.addf %127, %130 : vector<8x1xf32>
    %132 = math.rsqrt %131 : vector<8x1xf32>
    %133 = vector.broadcast %132 : vector<8x1xf32> to vector<8x32xf32>
    %134 = arith.mulf %129, %133 : vector<8x32xf32>
    %135 = vector.broadcast %114 : vector<1x32xf32> to vector<8x32xf32>
    %136 = arith.mulf %134, %135 : vector<8x32xf32>
    %137 = vector.broadcast %116 : vector<1x32xf32> to vector<8x32xf32>
    %138 = arith.addf %136, %137 : vector<8x32xf32>
    %139 = arith.truncf %138 : vector<8x32xf32> to vector<8x32xbf16>
    %c0_55 = arith.constant 0 : index
    %c0_56 = arith.constant 0 : index
    %c0_57 = arith.constant 0 : index
    %140 = vector.load %arg10[%c0_55, %c0_56, %c0_57] : memref<1x32x64xbf16, #tpu.memory_space<vmem>>, vector<1x32x64xbf16>
    %141 = vector.shape_cast %140 : vector<1x32x64xbf16> to vector<32x64xbf16>
    %cst_58 = arith.constant dense<0.000000e+00> : vector<8x64xf32>
    %142 = tpu.matmul %139, %141, %cst_58 {dimension_numbers = #tpu.dot_dimension_numbers<[1], [0], [0], [1], [0, 0, 1, 1], [], []>} : vector<8x32xbf16>, vector<32x64xbf16>, vector<8x64xf32> -> vector<8x64xf32>
    %c0_59 = arith.constant 0 : index
    %c0_60 = arith.constant 0 : index
    %c0_61 = arith.constant 0 : index
    %143 = vector.load %arg11[%c0_59, %c0_60, %c0_61] : memref<1x1x64xf32, #tpu.memory_space<vmem>>, vector<1x1x64xf32>
    %144 = vector.shape_cast %143 : vector<1x1x64xf32> to vector<1x64xf32>
    %145 = vector.broadcast %144 : vector<1x64xf32> to vector<8x64xf32>
    %146 = arith.addf %142, %145 : vector<8x64xf32>
    %cst_62 = arith.constant 0.000000e+00 : f32
    %147 = vector.broadcast %cst_62 : f32 to vector<8x64xf32>
    %148 = arith.maximumf %146, %147 : vector<8x64xf32>
    %149 = arith.truncf %148 : vector<8x64xf32> to vector<8x64xbf16>
    %c0_63 = arith.constant 0 : index
    %c0_64 = arith.constant 0 : index
    %c0_65 = arith.constant 0 : index
    %150 = vector.load %arg12[%c0_63, %c0_64, %c0_65] : memref<1x64x32xbf16, #tpu.memory_space<vmem>>, vector<1x64x32xbf16>
    %151 = vector.shape_cast %150 : vector<1x64x32xbf16> to vector<64x32xbf16>
    %cst_66 = arith.constant dense<0.000000e+00> : vector<8x32xf32>
    %152 = tpu.matmul %149, %151, %cst_66 {dimension_numbers = #tpu.dot_dimension_numbers<[1], [0], [0], [1], [0, 0, 1, 1], [], []>} : vector<8x64xbf16>, vector<64x32xbf16>, vector<8x32xf32> -> vector<8x32xf32>
    %c0_67 = arith.constant 0 : index
    %c0_68 = arith.constant 0 : index
    %c0_69 = arith.constant 0 : index
    %153 = vector.load %arg13[%c0_67, %c0_68, %c0_69] : memref<1x1x32xf32, #tpu.memory_space<vmem>>, vector<1x1x32xf32>
    %154 = vector.shape_cast %153 : vector<1x1x32xf32> to vector<1x32xf32>
    %155 = vector.broadcast %154 : vector<1x32xf32> to vector<8x32xf32>
    %156 = arith.addf %152, %155 : vector<8x32xf32>
    %157 = arith.addf %156, %138 : vector<8x32xf32>
    %c0_70 = arith.constant 0 : index
    %c0_71 = arith.constant 0 : index
    %c0_72 = arith.constant 0 : index
    %158 = vector.load %arg14[%c0_70, %c0_71, %c0_72] : memref<1x1x32xf32, #tpu.memory_space<vmem>>, vector<1x1x32xf32>
    %159 = vector.shape_cast %158 : vector<1x1x32xf32> to vector<1x32xf32>
    %c0_73 = arith.constant 0 : index
    %c0_74 = arith.constant 0 : index
    %c0_75 = arith.constant 0 : index
    %160 = vector.load %arg15[%c0_73, %c0_74, %c0_75] : memref<1x1x32xf32, #tpu.memory_space<vmem>>, vector<1x1x32xf32>
    %161 = vector.shape_cast %160 : vector<1x1x32xf32> to vector<1x32xf32>
    %cst_76 = arith.constant dense<0.000000e+00> : vector<8xf32>
    %162 = vector.multi_reduction <add>, %157, %cst_76 [1] : vector<8x32xf32> to vector<8xf32>
    %163 = vector.shape_cast %162 : vector<8xf32> to vector<8x1xf32>
    %cst_77 = arith.constant 3.200000e+01 : f32
    %164 = vector.broadcast %cst_77 : f32 to vector<8x1xf32>
    %165 = arith.divf %163, %164 : vector<8x1xf32>
    %166 = vector.broadcast %165 : vector<8x1xf32> to vector<8x32xf32>
    %167 = arith.subf %157, %166 : vector<8x32xf32>
    %168 = arith.mulf %167, %167 : vector<8x32xf32>
    %cst_78 = arith.constant dense<0.000000e+00> : vector<8xf32>
    %169 = vector.multi_reduction <add>, %168, %cst_78 [1] : vector<8x32xf32> to vector<8xf32>
    %170 = vector.shape_cast %169 : vector<8xf32> to vector<8x1xf32>
    %cst_79 = arith.constant 3.200000e+01 : f32
    %171 = vector.broadcast %cst_79 : f32 to vector<8x1xf32>
    %172 = arith.divf %170, %171 : vector<8x1xf32>
    %173 = vector.broadcast %165 : vector<8x1xf32> to vector<8x32xf32>
    %174 = arith.subf %157, %173 : vector<8x32xf32>
    %cst_80 = arith.constant 9.99999974E-6 : f32
    %175 = vector.broadcast %cst_80 : f32 to vector<8x1xf32>
    %176 = arith.addf %172, %175 : vector<8x1xf32>
    %177 = math.rsqrt %176 : vector<8x1xf32>
    %178 = vector.broadcast %177 : vector<8x1xf32> to vector<8x32xf32>
    %179 = arith.mulf %174, %178 : vector<8x32xf32>
    %180 = vector.broadcast %159 : vector<1x32xf32> to vector<8x32xf32>
    %181 = arith.mulf %179, %180 : vector<8x32xf32>
    %182 = vector.broadcast %161 : vector<1x32xf32> to vector<8x32xf32>
    %183 = arith.addf %181, %182 : vector<8x32xf32>
    %c0_81 = arith.constant 0 : index
    %c0_82 = arith.constant 0 : index
    %184 = vector.load %arg18[%c0_81, %c0_82] : memref<8x32xf32, #tpu.memory_space<vmem>>, vector<8x32xf32>
    tpu.vector_store %arg18[%c0_81, %c0_82], %183 {strides = array<i32>} : memref<8x32xf32, #tpu.memory_space<vmem>>, vector<8x32xf32>,
    %c1_i32 = arith.constant 1 : i32
    %185 = arith.cmpi eq, %arg1, %c1_i32 : i32
    %186 = arith.extui %185 : i1 to i32
    %c0_i32_83 = arith.constant 0 : i32
    %187 = arith.cmpi ne, %186, %c0_i32_83 : i32
    scf.if %187 {
      %c0_84 = arith.constant 0 : index
      %c0_85 = arith.constant 0 : index
      %c0_86 = arith.constant 0 : index
      %188 = vector.load %arg16[%c0_84, %c0_85, %c0_86] : memref<1x8x32xf32, #tpu.memory_space<vmem>>, vector<1x8x32xf32>
      %189 = vector.shape_cast %188 : vector<1x8x32xf32> to vector<8x32xf32>
      %190 = vector.shape_cast %183 : vector<8x32xf32> to vector<1x8x32xf32>
      tpu.vector_store %arg16[%c0_84, %c0_85, %c0_86], %190 {strides = array<i32>} : memref<1x8x32xf32, #tpu.memory_space<vmem>>, vector<1x8x32xf32>,
    } else {
    }
    return
  }
  func.func @transform_0(%arg0: i32, %arg1: i32) -> (i32, i32, i32) {
    %c0_i32 = arith.constant 0 : i32
    %c0_i32_0 = arith.constant 0 : i32
    %c0_i32_1 = arith.constant 0 : i32
    return %arg0, %c0_i32, %c0_i32_0 : i32, i32, i32
  }
  func.func @transform_1(%arg0: i32, %arg1: i32) -> (i32, i32, i32) {
    %c0_i32 = arith.constant 0 : i32
    %c0_i32_0 = arith.constant 0 : i32
    %c0_i32_1 = arith.constant 0 : i32
    return %arg0, %c0_i32, %c0_i32_0 : i32, i32, i32
  }
  func.func @transform_2(%arg0: i32, %arg1: i32) -> (i32, i32, i32) {
    %c0_i32 = arith.constant 0 : i32
    %c0_i32_0 = arith.constant 0 : i32
    %c0_i32_1 = arith.constant 0 : i32
    return %arg1, %c0_i32, %c0_i32_0 : i32, i32, i32
  }
  func.func @transform_3(%arg0: i32, %arg1: i32) -> (i32, i32, i32) {
    %c0_i32 = arith.constant 0 : i32
    %c0_i32_0 = arith.constant 0 : i32
    %c0_i32_1 = arith.constant 0 : i32
    return %arg1, %c0_i32, %c0_i32_0 : i32, i32, i32
  }
  func.func @transform_4(%arg0: i32, %arg1: i32) -> (i32, i32, i32) {
    %c0_i32 = arith.constant 0 : i32
    %c0_i32_0 = arith.constant 0 : i32
    %c0_i32_1 = arith.constant 0 : i32
    return %arg1, %c0_i32, %c0_i32_0 : i32, i32, i32
  }
  func.func @transform_5(%arg0: i32, %arg1: i32) -> (i32, i32, i32) {
    %c0_i32 = arith.constant 0 : i32
    %c0_i32_0 = arith.constant 0 : i32
    %c0_i32_1 = arith.constant 0 : i32
    return %arg1, %c0_i32, %c0_i32_0 : i32, i32, i32
  }
  func.func @transform_6(%arg0: i32, %arg1: i32) -> (i32, i32, i32) {
    %c0_i32 = arith.constant 0 : i32
    %c0_i32_0 = arith.constant 0 : i32
    %c0_i32_1 = arith.constant 0 : i32
    return %arg1, %c0_i32, %c0_i32_0 : i32, i32, i32
  }
  func.func @transform_7(%arg0: i32, %arg1: i32) -> (i32, i32, i32) {
    %c0_i32 = arith.constant 0 : i32
    %c0_i32_0 = arith.constant 0 : i32
    %c0_i32_1 = arith.constant 0 : i32
    return %arg1, %c0_i32, %c0_i32_0 : i32, i32, i32
  }
  func.func @transform_8(%arg0: i32, %arg1: i32) -> (i32, i32, i32) {
    %c0_i32 = arith.constant 0 : i32
    %c0_i32_0 = arith.constant 0 : i32
    %c0_i32_1 = arith.constant 0 : i32
    return %arg1, %c0_i32, %c0_i32_0 : i32, i32, i32
  }
  func.func @transform_9(%arg0: i32, %arg1: i32) -> (i32, i32, i32) {
    %c0_i32 = arith.constant 0 : i32
    %c0_i32_0 = arith.constant 0 : i32
    %c0_i32_1 = arith.constant 0 : i32
    return %arg1, %c0_i32, %c0_i32_0 : i32, i32, i32
  }
  func.func @transform_10(%arg0: i32, %arg1: i32) -> (i32, i32, i32) {
    %c0_i32 = arith.constant 0 : i32
    %c0_i32_0 = arith.constant 0 : i32
    %c0_i32_1 = arith.constant 0 : i32
    return %arg1, %c0_i32, %c0_i32_0 : i32, i32, i32
  }
  func.func @transform_11(%arg0: i32, %arg1: i32) -> (i32, i32, i32) {
    %c0_i32 = arith.constant 0 : i32
    %c0_i32_0 = arith.constant 0 : i32
    %c0_i32_1 = arith.constant 0 : i32
    return %arg1, %c0_i32, %c0_i32_0 : i32, i32, i32
  }
  func.func @transform_12(%arg0: i32, %arg1: i32) -> (i32, i32, i32) {
    %c0_i32 = arith.constant 0 : i32
    %c0_i32_0 = arith.constant 0 : i32
    %c0_i32_1 = arith.constant 0 : i32
    return %arg1, %c0_i32, %c0_i32_0 : i32, i32, i32
  }
  func.func @transform_13(%arg0: i32, %arg1: i32) -> (i32, i32, i32) {
    %c0_i32 = arith.constant 0 : i32
    %c0_i32_0 = arith.constant 0 : i32
    %c0_i32_1 = arith.constant 0 : i32
    return %arg1, %c0_i32, %c0_i32_0 : i32, i32, i32
  }
  func.func @transform_14(%arg0: i32, %arg1: i32) -> (i32, i32, i32) {
    %c0_i32 = arith.constant 0 : i32
    %c0_i32_0 = arith.constant 0 : i32
    %c0_i32_1 = arith.constant 0 : i32
    return %arg0, %c0_i32, %c0_i32_0 : i32, i32, i32
  }
  func.func @transform_15(%arg0: i32, %arg1: i32) -> (i32, i32, i32, i32) {
    %c0_i32 = arith.constant 0 : i32
    %c0_i32_0 = arith.constant 0 : i32
    %c0_i32_1 = arith.constant 0 : i32
    return %arg1, %arg0, %c0_i32, %c0_i32_0 : i32, i32, i32, i32
  }
}

</mosaic_0001>

<llo_original>
// kernel: tpu_custom_call.1
$region0: #{tpu_custom_call.1}
  #allocation0 [shape = 'u32[]', space=smem, size = 0x4, offset = 0x4, fixed_abs, tag = 'smem constant byte address 0x4 - core index']
  #allocation1 [shape = 'u32[144,128]{1,0:T(1,128)}', space=vmem, size = 0x12000, scoped, tag = 'internal scratch']
  #allocation2 [shape = 'f32[8,32]{1,0:T(8,128)}', space=vmem, size = 0x1000, scoped, tag = 'scratch operand']
  %s0 = inlined_call_operand.hbm [shape: f32[2,1,8], index: 0, kind: input, shape index: {}]
  %s1 = inlined_call_operand.hbm [shape: f32[2,8,32], index: 1, kind: input, shape index: {}]
  %s2 = inlined_call_operand.vmem [shape: bf16[2,32,32], index: 2, kind: input, shape index: {}]
  %s3 = inlined_call_operand.vmem [shape: bf16[2,32,32], index: 3, kind: input, shape index: {}]
  %s4 = inlined_call_operand.vmem [shape: bf16[2,32,32], index: 4, kind: input, shape index: {}]
  %s5 = inlined_call_operand.hbm [shape: bf16[2,32,32], index: 5, kind: input, shape index: {}]
  %s6 = inlined_call_operand.vmem [shape: f32[2,1,32], index: 6, kind: input, shape index: {}]
  %s7 = inlined_call_operand.vmem [shape: f32[2,1,32], index: 7, kind: input, shape index: {}]
  %s8 = inlined_call_operand.hbm [shape: bf16[2,32,64], index: 8, kind: input, shape index: {}]
  %s9 = inlined_call_operand.hbm [shape: f32[2,1,64], index: 9, kind: input, shape index: {}]
  %s10 = inlined_call_operand.vmem [shape: bf16[2,64,32], index: 10, kind: input, shape index: {}]
  %s11 = inlined_call_operand.vmem [shape: f32[2,1,32], index: 11, kind: input, shape index: {}]
  %s12 = inlined_call_operand.vmem [shape: f32[2,1,32], index: 12, kind: input, shape index: {}]
  %s13 = inlined_call_operand.vmem [shape: f32[2,1,32], index: 13, kind: input, shape index: {}]
  %s14 = inlined_call_operand.hbm [shape: f32[2,8,32], index: 14, kind: output, shape index: {0}]
  %s15 = inlined_call_operand.vmem [shape: f32[2,2,32,8], index: 15, kind: output, shape index: {1}]
  %16 = xla_tuple %s14, %s15
  %s17 = sld [smem:[#allocation0]]
  $region125: #{tpu_custom_call.1} parent=0
    _
  %s19 = ssub.s32 1, %s17
  %s20 = scalar_select 0, %s19, %s17
  $region1: #{tpu_custom_call.1} parent=0
    #allocation3 [shape = 'u8[1024]{0}', space=vmem, size = 0x400, scoped, tag = 'input window, operand 0']
    #allocation4 [shape = 's32[2]{0}', space=sflag, size = 0x8, scoped, tag = 'scoped memory for tpu_custom_call.1']
    #allocation5 [shape = 's32[2]{0}', space=sflag, size = 0x8, scoped, tag = 'scoped memory for tpu_custom_call.1']
    #allocation6 [shape = 'u8[8192]{0}', space=vmem, size = 0x2000, scoped, tag = 'input window, operand 1']
    #allocation7 [shape = 's32[2]{0}', space=sflag, size = 0x8, scoped, tag = 'scoped memory for tpu_custom_call.1']
    #allocation8 [shape = 'u8[16384]{0}', space=vmem, size = 0x4000, scoped, tag = 'input window, operand 5']
    #allocation9 [shape = 'u8[16384]{0}', space=vmem, size = 0x4000, scoped, tag = 'input window, operand 8']
    #allocation10 [shape = 's32[2]{0}', space=sflag, size = 0x8, scoped, tag = 'scoped memory for tpu_custom_call.1']
    #allocation11 [shape = 'u8[1024]{0}', space=vmem, size = 0x400, scoped, tag = 'input window, operand 9']
    #allocation12 [shape = 'u8[8192]{0}', space=vmem, size = 0x2000, scoped, tag = 'output window, operand 0']
    %21 = vsyncpa [#allocation4], 0
    %s22 = scalar_lea.sflag [#allocation4], 1
    %23 = vsyncpa %s22, 0
    %24 = vsyncpa [#allocation7], 0
    %s25 = scalar_lea.sflag [#allocation7], 1
    %26 = vsyncpa %s25, 0
    %27 = vsyncpa [#allocation10], 0
    %s28 = scalar_lea.sflag [#allocation10], 1
    %29 = vsyncpa %s28, 0
    %30 = vsyncpa [#allocation5], 0
    %s31 = scalar_lea.sflag [#allocation5], 1
    %32 = vsyncpa %s31, 0
    loop: start=0, step=1, limit=6
    $region2: #{tpu_custom_call.1} parent=1 // loop_pre_header
      _
    $region3: #{tpu_custom_call.1} parent=1 // loop_header
      %s34 = sphi 0, %s38
      %p35 = scmp.ge.s32.totalorder %s34, 6
      %s41 = sphi 0, %s53
      %s42 = sphi 0, %s49
      %s43 = sphi 0, %s41
      %s44 = sphi 0, %s42
      %s45 = sphi 0, %s43
      %s46 = sphi 0, %s44
      %s56 = sphi 0, %s58
      %s59 = sphi 0, %s56
      %s60 = sphi 0, %s59
      %s76 = sphi 0, %s60
      %s82 = sphi 0, %s84
      %s85 = sphi 0, %s82
      %s86 = sphi 0, %s85
      %s102 = sphi 0, %s86
      %s108 = sphi 0, %s110
      %s111 = sphi 0, %s108
      %s112 = sphi 0, %s111
      %s128 = sphi 0, %s112
      %s134 = sphi 0, %s136
      %s137 = sphi 0, %s134
      %s138 = sphi 0, %s137
      %s154 = sphi 0, %s138
      %s160 = sphi 0, %s162
      %s163 = sphi 0, %s160
      %s164 = sphi 0, %s163
      %s180 = sphi 0, %s164
      %s186 = sphi 0, %s188
      %s189 = sphi 0, %s186
      %s190 = sphi 0, %s189
      %s206 = sphi 0, %s190
      %s212 = sphi 0, %s214
      %s215 = sphi 0, %s212
      %s216 = sphi 0, %s215
      %s232 = sphi 0, %s216
      %s238 = sphi 0, %s240
      %s241 = sphi 0, %s238
      %s242 = sphi 0, %s241
      %s258 = sphi 0, %s242
      %s264 = sphi 0, %s266
      %s267 = sphi 0, %s264
      %s268 = sphi 0, %s267
      %s284 = sphi 0, %s268
      %s290 = sphi 0, %s292
      %s293 = sphi 0, %s290
      %s294 = sphi 0, %s293
      %s310 = sphi 0, %s294
      %s316 = sphi 0, %s318
      %s319 = sphi 0, %s316
      %s320 = sphi 0, %s319
      %s336 = sphi 0, %s320
      %s342 = sphi 0, %s344
      %s345 = sphi 0, %s342
      %s346 = sphi 0, %s345
      %s362 = sphi 0, %s346
      %s368 = sphi 0, %s370
      %s371 = sphi 0, %s368
      %s372 = sphi 0, %s371
      %s388 = sphi 0, %s372
      %s394 = sphi 0, %s396
      %s397 = sphi 0, %s394
      %s398 = sphi 0, %s397
      %s414 = sphi 0, %s398
      %s420 = sphi 0, %s422
      %s423 = sphi 0, %s420
      %s424 = sphi 0, %s423
      %s440 = sphi 0, %s424
      %s448 = sphi 0, %s450
      %s451 = sphi 0, %s448
      %s452 = sphi 0, %s451
      %s468 = sphi 0, %s452
    $region4: #{tpu_custom_call.1} parent=1 // loop_header_branch
      %37 = sbr.rel (%p35) target = $region8
    $region5: #{tpu_custom_call.1} parent=1 // loop_body
      %s39 = ssub.s32 %s34, 1
      %s40 = ssub.s32 %s34, 2
      %s47 = sadd.s32 1, %s42
      %p48 = scmp.ge.s32.totalorder %s47, 2
      %s49 = scalar_select %p48, 0, %s47
      %s50 = sadd.s32 1, %s41
      %s51 = scalar_select %p48, %s50, %s41
      %p52 = scmp.ge.s32.totalorder %s51, 2
      %s53 = scalar_select %p52, 0, %s51
      %s54 = ssub.s32 %s41, %s53
      %p55 = scmp.eq.s32.totalorder %s54, 0
      %s57 = sadd.s32 %s56, 1
      %s58 = scalar_select %p55, %s56, %s57
      %p61 = pneg %p55
      %p62 = scmp.eq.s32.totalorder %s34, 3
      %p63 = por %p61, %p62
      %p64 = scmp.ne.s32.totalorder %s56, %s59
      %p65 = scmp.eq.s32.totalorder %s34, 0
      %p66 = por %p64, %p65
      %p67 = scmp.ne.s32.totalorder %s56, %s59
      %p68 = scmp.eq.s32.totalorder %s39, 3
      %p69 = por %p67, %p68
      %p70 = scmp.ne.s32.totalorder %s59, %s60
      %p71 = scmp.eq.s32.totalorder %s39, 0
      %p72 = por %p70, %p71
      %p73 = scmp.ne.s32.totalorder %s59, %s60
      %p74 = scmp.eq.s32.totalorder %s40, 3
      %p75 = por %p73, %p74
      %p77 = scmp.ne.s32.totalorder %s60, %s76
      %p78 = scmp.eq.s32.totalorder %s40, 0
      %p79 = por %p77, %p78
      %s80 = ssub.s32 %s41, %s53
      %p81 = scmp.eq.s32.totalorder %s80, 0
      %s83 = sadd.s32 %s82, 1
      %s84 = scalar_select %p81, %s82, %s83
      %p87 = pneg %p81
      %p88 = scmp.eq.s32.totalorder %s34, 3
      %p89 = por %p87, %p88
      %p90 = scmp.ne.s32.totalorder %s82, %s85
      %p91 = scmp.eq.s32.totalorder %s34, 0
      %p92 = por %p90, %p91
      %p93 = scmp.ne.s32.totalorder %s82, %s85
      %p94 = scmp.eq.s32.totalorder %s39, 3
      %p95 = por %p93, %p94
      %p96 = scmp.ne.s32.totalorder %s85, %s86
      %p97 = scmp.eq.s32.totalorder %s39, 0
      %p98 = por %p96, %p97
      %p99 = scmp.ne.s32.totalorder %s85, %s86
      %p100 = scmp.eq.s32.totalorder %s40, 3
      %p101 = por %p99, %p100
      %p103 = scmp.ne.s32.totalorder %s86, %s102
      %p104 = scmp.eq.s32.totalorder %s40, 0
      %p105 = por %p103, %p104
      %s106 = ssub.s32 %s42, %s49
      %p107 = scmp.eq.s32.totalorder %s106, 0
      %s109 = sadd.s32 %s108, 1
      %s110 = scalar_select %p107, %s108, %s109
      %p113 = pneg %p107
      %p114 = scmp.eq.s32.totalorder %s34, 3
      %p115 = por %p113, %p114
      %p116 = scmp.ne.s32.totalorder %s108, %s111
      %p117 = scmp.eq.s32.totalorder %s34, 0
      %p118 = por %p116, %p117
      %p119 = scmp.ne.s32.totalorder %s108, %s111
      %p120 = scmp.eq.s32.totalorder %s39, 3
      %p121 = por %p119, %p120
      %p122 = scmp.ne.s32.totalorder %s111, %s112
      %p123 = scmp.eq.s32.totalorder %s39, 0
      %p124 = por %p122, %p123
      %p125 = scmp.ne.s32.totalorder %s111, %s112
      %p126 = scmp.eq.s32.totalorder %s40, 3
      %p127 = por %p125, %p126
      %p129 = scmp.ne.s32.totalorder %s112, %s128
      %p130 = scmp.eq.s32.totalorder %s40, 0
      %p131 = por %p129, %p130
      %s132 = ssub.s32 %s42, %s49
      %p133 = scmp.eq.s32.totalorder %s132, 0
      %s135 = sadd.s32 %s134, 1
      %s136 = scalar_select %p133, %s134, %s135
      %p139 = pneg %p133
      %p140 = scmp.eq.s32.totalorder %s34, 3
      %p141 = por %p139, %p140
      %p142 = scmp.ne.s32.totalorder %s134, %s137
      %p143 = scmp.eq.s32.totalorder %s34, 0
      %p144 = por %p142, %p143
      %p145 = scmp.ne.s32.totalorder %s134, %s137
      %p146 = scmp.eq.s32.totalorder %s39, 3
      %p147 = por %p145, %p146
      %p148 = scmp.ne.s32.totalorder %s137, %s138
      %p149 = scmp.eq.s32.totalorder %s39, 0
      %p150 = por %p148, %p149
      %p151 = scmp.ne.s32.totalorder %s137, %s138
      %p152 = scmp.eq.s32.totalorder %s40, 3
      %p153 = por %p151, %p152
      %p155 = scmp.ne.s32.totalorder %s138, %s154
      %p156 = scmp.eq.s32.totalorder %s40, 0
      %p157 = por %p155, %p156
      %s158 = ssub.s32 %s42, %s49
      %p159 = scmp.eq.s32.totalorder %s158, 0
      %s161 = sadd.s32 %s160, 1
      %s162 = scalar_select %p159, %s160, %s161
      %p165 = pneg %p159
      %p166 = scmp.eq.s32.totalorder %s34, 3
      %p167 = por %p165, %p166
      %p168 = scmp.ne.s32.totalorder %s160, %s163
      %p169 = scmp.eq.s32.totalorder %s34, 0
      %p170 = por %p168, %p169
      %p171 = scmp.ne.s32.totalorder %s160, %s163
      %p172 = scmp.eq.s32.totalorder %s39, 3
      %p173 = por %p171, %p172
      %p174 = scmp.ne.s32.totalorder %s163, %s164
      %p175 = scmp.eq.s32.totalorder %s39, 0
      %p176 = por %p174, %p175
      %p177 = scmp.ne.s32.totalorder %s163, %s164
      %p178 = scmp.eq.s32.totalorder %s40, 3
      %p179 = por %p177, %p178
      %p181 = scmp.ne.s32.totalorder %s164, %s180
      %p182 = scmp.eq.s32.totalorder %s40, 0
      %p183 = por %p181, %p182
      %s184 = ssub.s32 %s42, %s49
      %p185 = scmp.eq.s32.totalorder %s184, 0
      %s187 = sadd.s32 %s186, 1
      %s188 = scalar_select %p185, %s186, %s187
      %p191 = pneg %p185
      %p192 = scmp.eq.s32.totalorder %s34, 3
      %p193 = por %p191, %p192
      %p194 = scmp.ne.s32.totalorder %s186, %s189
      %p195 = scmp.eq.s32.totalorder %s34, 0
      %p196 = por %p194, %p195
      %p197 = scmp.ne.s32.totalorder %s186, %s189
      %p198 = scmp.eq.s32.totalorder %s39, 3
      %p199 = por %p197, %p198
      %p200 = scmp.ne.s32.totalorder %s189, %s190
      %p201 = scmp.eq.s32.totalorder %s39, 0
      %p202 = por %p200, %p201
      %p203 = scmp.ne.s32.totalorder %s189, %s190
      %p204 = scmp.eq.s32.totalorder %s40, 3
      %p205 = por %p203, %p204
      %p207 = scmp.ne.s32.totalorder %s190, %s206
      %p208 = scmp.eq.s32.totalorder %s40, 0
      %p209 = por %p207, %p208
      %s210 = ssub.s32 %s42, %s49
      %p211 = scmp.eq.s32.totalorder %s210, 0
      %s213 = sadd.s32 %s212, 1
      %s214 = scalar_select %p211, %s212, %s213
      %p217 = pneg %p211
      %p218 = scmp.eq.s32.totalorder %s34, 3
      %p219 = por %p217, %p218
      %p220 = scmp.ne.s32.totalorder %s212, %s215
      %p221 = scmp.eq.s32.totalorder %s34, 0
      %p222 = por %p220, %p221
      %p223 = scmp.ne.s32.totalorder %s212, %s215
      %p224 = scmp.eq.s32.totalorder %s39, 3
      %p225 = por %p223, %p224
      %p226 = scmp.ne.s32.totalorder %s215, %s216
      %p227 = scmp.eq.s32.totalorder %s39, 0
      %p228 = por %p226, %p227
      %p229 = scmp.ne.s32.totalorder %s215, %s216
      %p230 = scmp.eq.s32.totalorder %s40, 3
      %p231 = por %p229, %p230
      %p233 = scmp.ne.s32.totalorder %s216, %s232
      %p234 = scmp.eq.s32.totalorder %s40, 0
      %p235 = por %p233, %p234
      %s236 = ssub.s32 %s42, %s49
      %p237 = scmp.eq.s32.totalorder %s236, 0
      %s239 = sadd.s32 %s238, 1
      %s240 = scalar_select %p237, %s238, %s239
      %p243 = pneg %p237
      %p244 = scmp.eq.s32.totalorder %s34, 3
      %p245 = por %p243, %p244
      %p246 = scmp.ne.s32.totalorder %s238, %s241
      %p247 = scmp.eq.s32.totalorder %s34, 0
      %p248 = por %p246, %p247
      %p249 = scmp.ne.s32.totalorder %s238, %s241
      %p250 = scmp.eq.s32.totalorder %s39, 3
      %p251 = por %p249, %p250
      %p252 = scmp.ne.s32.totalorder %s241, %s242
      %p253 = scmp.eq.s32.totalorder %s39, 0
      %p254 = por %p252, %p253
      %p255 = scmp.ne.s32.totalorder %s241, %s242
      %p256 = scmp.eq.s32.totalorder %s40, 3
      %p257 = por %p255, %p256
      %p259 = scmp.ne.s32.totalorder %s242, %s258
      %p260 = scmp.eq.s32.totalorder %s40, 0
      %p261 = por %p259, %p260
      %s262 = ssub.s32 %s42, %s49
      %p263 = scmp.eq.s32.totalorder %s262, 0
      %s265 = sadd.s32 %s264, 1
      %s266 = scalar_select %p263, %s264, %s265
      %p269 = pneg %p263
      %p270 = scmp.eq.s32.totalorder %s34, 3
      %p271 = por %p269, %p270
      %p272 = scmp.ne.s32.totalorder %s264, %s267
      %p273 = scmp.eq.s32.totalorder %s34, 0
      %p274 = por %p272, %p273
      %p275 = scmp.ne.s32.totalorder %s264, %s267
      %p276 = scmp.eq.s32.totalorder %s39, 3
      %p277 = por %p275, %p276
      %p278 = scmp.ne.s32.totalorder %s267, %s268
      %p279 = scmp.eq.s32.totalorder %s39, 0
      %p280 = por %p278, %p279
      %p281 = scmp.ne.s32.totalorder %s267, %s268
      %p282 = scmp.eq.s32.totalorder %s40, 3
      %p283 = por %p281, %p282
      %p285 = scmp.ne.s32.totalorder %s268, %s284
      %p286 = scmp.eq.s32.totalorder %s40, 0
      %p287 = por %p285, %p286
      %s288 = ssub.s32 %s42, %s49
      %p289 = scmp.eq.s32.totalorder %s288, 0
      %s291 = sadd.s32 %s290, 1
      %s292 = scalar_select %p289, %s290, %s291
      %p295 = pneg %p289
      %p296 = scmp.eq.s32.totalorder %s34, 3
      %p297 = por %p295, %p296
      %p298 = scmp.ne.s32.totalorder %s290, %s293
      %p299 = scmp.eq.s32.totalorder %s34, 0
      %p300 = por %p298, %p299
      %p301 = scmp.ne.s32.totalorder %s290, %s293
      %p302 = scmp.eq.s32.totalorder %s39, 3
      %p303 = por %p301, %p302
      %p304 = scmp.ne.s32.totalorder %s293, %s294
      %p305 = scmp.eq.s32.totalorder %s39, 0
      %p306 = por %p304, %p305
      %p307 = scmp.ne.s32.totalorder %s293, %s294
      %p308 = scmp.eq.s32.totalorder %s40, 3
      %p309 = por %p307, %p308
      %p311 = scmp.ne.s32.totalorder %s294, %s310
      %p312 = scmp.eq.s32.totalorder %s40, 0
      %p313 = por %p311, %p312
      %s314 = ssub.s32 %s42, %s49
      %p315 = scmp.eq.s32.totalorder %s314, 0
      %s317 = sadd.s32 %s316, 1
      %s318 = scalar_select %p315, %s316, %s317
      %p321 = pneg %p315
      %p322 = scmp.eq.s32.totalorder %s34, 3
      %p323 = por %p321, %p322
      %p324 = scmp.ne.s32.totalorder %s316, %s319
      %p325 = scmp.eq.s32.totalorder %s34, 0
      %p326 = por %p324, %p325
      %p327 = scmp.ne.s32.totalorder %s316, %s319
      %p328 = scmp.eq.s32.totalorder %s39, 3
      %p329 = por %p327, %p328
      %p330 = scmp.ne.s32.totalorder %s319, %s320
      %p331 = scmp.eq.s32.totalorder %s39, 0
      %p332 = por %p330, %p331
      %p333 = scmp.ne.s32.totalorder %s319, %s320
      %p334 = scmp.eq.s32.totalorder %s40, 3
      %p335 = por %p333, %p334
      %p337 = scmp.ne.s32.totalorder %s320, %s336
      %p338 = scmp.eq.s32.totalorder %s40, 0
      %p339 = por %p337, %p338
      %s340 = ssub.s32 %s42, %s49
      %p341 = scmp.eq.s32.totalorder %s340, 0
      %s343 = sadd.s32 %s342, 1
      %s344 = scalar_select %p341, %s342, %s343
      %p347 = pneg %p341
      %p348 = scmp.eq.s32.totalorder %s34, 3
      %p349 = por %p347, %p348
      %p350 = scmp.ne.s32.totalorder %s342, %s345
      %p351 = scmp.eq.s32.totalorder %s34, 0
      %p352 = por %p350, %p351
      %p353 = scmp.ne.s32.totalorder %s342, %s345
      %p354 = scmp.eq.s32.totalorder %s39, 3
      %p355 = por %p353, %p354
      %p356 = scmp.ne.s32.totalorder %s345, %s346
      %p357 = scmp.eq.s32.totalorder %s39, 0
      %p358 = por %p356, %p357
      %p359 = scmp.ne.s32.totalorder %s345, %s346
      %p360 = scmp.eq.s32.totalorder %s40, 3
      %p361 = por %p359, %p360
      %p363 = scmp.ne.s32.totalorder %s346, %s362
      %p364 = scmp.eq.s32.totalorder %s40, 0
      %p365 = por %p363, %p364
      %s366 = ssub.s32 %s42, %s49
      %p367 = scmp.eq.s32.totalorder %s366, 0
      %s369 = sadd.s32 %s368, 1
      %s370 = scalar_select %p367, %s368, %s369
      %p373 = pneg %p367
      %p374 = scmp.eq.s32.totalorder %s34, 3
      %p375 = por %p373, %p374
      %p376 = scmp.ne.s32.totalorder %s368, %s371
      %p377 = scmp.eq.s32.totalorder %s34, 0
      %p378 = por %p376, %p377
      %p379 = scmp.ne.s32.totalorder %s368, %s371
      %p380 = scmp.eq.s32.totalorder %s39, 3
      %p381 = por %p379, %p380
      %p382 = scmp.ne.s32.totalorder %s371, %s372
      %p383 = scmp.eq.s32.totalorder %s39, 0
      %p384 = por %p382, %p383
      %p385 = scmp.ne.s32.totalorder %s371, %s372
      %p386 = scmp.eq.s32.totalorder %s40, 3
      %p387 = por %p385, %p386
      %p389 = scmp.ne.s32.totalorder %s372, %s388
      %p390 = scmp.eq.s32.totalorder %s40, 0
      %p391 = por %p389, %p390
      %s392 = ssub.s32 %s42, %s49
      %p393 = scmp.eq.s32.totalorder %s392, 0
      %s395 = sadd.s32 %s394, 1
      %s396 = scalar_select %p393, %s394, %s395
      %p399 = pneg %p393
      %p400 = scmp.eq.s32.totalorder %s34, 3
      %p401 = por %p399, %p400
      %p402 = scmp.ne.s32.totalorder %s394, %s397
      %p403 = scmp.eq.s32.totalorder %s34, 0
      %p404 = por %p402, %p403
      %p405 = scmp.ne.s32.totalorder %s394, %s397
      %p406 = scmp.eq.s32.totalorder %s39, 3
      %p407 = por %p405, %p406
      %p408 = scmp.ne.s32.totalorder %s397, %s398
      %p409 = scmp.eq.s32.totalorder %s39, 0
      %p410 = por %p408, %p409
      %p411 = scmp.ne.s32.totalorder %s397, %s398
      %p412 = scmp.eq.s32.totalorder %s40, 3
      %p413 = por %p411, %p412
      %p415 = scmp.ne.s32.totalorder %s398, %s414
      %p416 = scmp.eq.s32.totalorder %s40, 0
      %p417 = por %p415, %p416
      %s418 = ssub.s32 %s41, %s53
      %p419 = scmp.eq.s32.totalorder %s418, 0
      %s421 = sadd.s32 %s420, 1
      %s422 = scalar_select %p419, %s420, %s421
      %p425 = pneg %p419
      %p426 = scmp.eq.s32.totalorder %s34, 3
      %p427 = por %p425, %p426
      %p428 = scmp.ne.s32.totalorder %s420, %s423
      %p429 = scmp.eq.s32.totalorder %s34, 0
      %p430 = por %p428, %p429
      %p431 = scmp.ne.s32.totalorder %s420, %s423
      %p432 = scmp.eq.s32.totalorder %s39, 3
      %p433 = por %p431, %p432
      %p434 = scmp.ne.s32.totalorder %s423, %s424
      %p435 = scmp.eq.s32.totalorder %s39, 0
      %p436 = por %p434, %p435
      %p437 = scmp.ne.s32.totalorder %s423, %s424
      %p438 = scmp.eq.s32.totalorder %s40, 3
      %p439 = por %p437, %p438
      %p441 = scmp.ne.s32.totalorder %s424, %s440
      %p442 = scmp.eq.s32.totalorder %s40, 0
      %p443 = por %p441, %p442
      %s444 = ssub.s32 %s42, %s49
      %s445 = ssub.s32 %s41, %s53
      %s446 = sor.u32 %s444, %s445
      %p447 = scmp.eq.s32.totalorder %s446, 0
      %s449 = sadd.s32 %s448, 1
      %s450 = scalar_select %p447, %s448, %s449
      %p453 = pneg %p447
      %p454 = scmp.eq.s32.totalorder %s34, 3
      %p455 = por %p453, %p454
      %p456 = scmp.ne.s32.totalorder %s448, %s451
      %p457 = scmp.eq.s32.totalorder %s34, 0
      %p458 = por %p456, %p457
      %p459 = scmp.ne.s32.totalorder %s448, %s451
      %p460 = scmp.eq.s32.totalorder %s39, 3
      %p461 = por %p459, %p460
      %p462 = scmp.ne.s32.totalorder %s451, %s452
      %p463 = scmp.eq.s32.totalorder %s39, 0
      %p464 = por %p462, %p463
      %p465 = scmp.ne.s32.totalorder %s451, %s452
      %p466 = scmp.eq.s32.totalorder %s40, 3
      %p467 = por %p465, %p466
      %p469 = scmp.ne.s32.totalorder %s452, %s468
      %p470 = scmp.eq.s32.totalorder %s40, 0
      %p471 = por %p469, %p470
      %p472 = scmp.le.s32.totalorder 1, %s34
      %p473 = scmp.lt.s32.totalorder %s34, 5
      %p474 = pnand %p472, %p473
      %p475 = pneg %p474
      // Predicated region
      $region9: #{tpu_custom_call.1} parent=5 // pred_check
        _
      $region10: #{tpu_custom_call.1} parent=5 // pred_check_branch
        %477 = sbr.rel (%p474) target = $region12
      $region11: #{tpu_custom_call.1} parent=5 // pred_region
        %s478 = ssub.s32 %s34, 1
      $region12: #{tpu_custom_call.1} parent=5 // pred_fallthru
        _
      %p479 = scmp.lt.s32.totalorder %s34, 4
      // Predicated region
      $region13: #{tpu_custom_call.1} parent=5 // pred_check
        %p480 = pneg %p479
      $region14: #{tpu_custom_call.1} parent=5 // pred_check_branch
        %482 = sbr.rel (%p480) target = $region16
      $region15: #{tpu_custom_call.1} parent=5 // pred_region
        // Predicated region
        $region17: #{tpu_custom_call.1} parent=15 // pred_check
          %p483 = pneg %p66
        $region18: #{tpu_custom_call.1} parent=15 // pred_check_branch
          %485 = sbr.rel (%p483) target = $region20
        $region19: #{tpu_custom_call.1} parent=15 // pred_region
          %s486 = sand.u32 %s56, 1
          %s487 = scalar_lea.sflag [#allocation4], %s486
          %s488 = sand.u32 %s56, 1
          %s489 = scalar_lea.vmem [#allocation3], %s488
          %s491 = ssub.s32 16, 16
          %492 = vsyncadd %s487, %s491
          %s493 = smul.addr %s41, 16
          %s494 = scalar_lea.hbm %s0, %s493
          %s496 = sshll.u32 %s489, 4
          %s497 = int_to_ptr.vmem [resolvable:$true] %s496
          %499 = dma.hbm_to_vmem [thread:$0]  %s494, 16, %s497, %s487
        $region20: #{tpu_custom_call.1} parent=15 // pred_fallthru
          _
        // Predicated region
        $region21: #{tpu_custom_call.1} parent=15 // pred_check
          %p500 = pneg %p92
        $region22: #{tpu_custom_call.1} parent=15 // pred_check_branch
          %502 = sbr.rel (%p500) target = $region24
        $region23: #{tpu_custom_call.1} parent=15 // pred_region
          %s503 = sand.u32 %s34, 1
          %s504 = scalar_lea.sflag [#allocation7], %s503
          %s505 = sand.u32 %s82, 1
          %s506 = smul.addr %s505, 8
          %s507 = scalar_lea.vmem [#allocation6], %s506
          %s509 = ssub.s32 128, 128
          %510 = vsyncadd %s504, %s509
          %s511 = smul.addr %s41, 128
          %s512 = scalar_lea.hbm %s1, %s511
          %s514 = sshll.u32 %s507, 4
          %s515 = int_to_ptr.vmem [resolvable:$true] %s514
          %517 = dma.hbm_to_vmem [thread:$0]  %s512, 128, %s515, %s504
        $region24: #{tpu_custom_call.1} parent=15 // pred_fallthru
          _
        // Predicated region
        $region25: #{tpu_custom_call.1} parent=15 // pred_check
          %p518 = pneg %p118
        $region26: #{tpu_custom_call.1} parent=15 // pred_check_branch
          %520 = sbr.rel (%p518) target = $region28
        $region27: #{tpu_custom_call.1} parent=15 // pred_region
          %p521 = scmp.lt.s32.totalorder %s42, 1
          %s522 = scalar_select %p521, %s42, 1
          %s523 = smul.addr %s522, 4
          %s524 = smul.addr %s523, 4
          %s525 = scalar_lea.vmem %s2, %s524
        $region28: #{tpu_custom_call.1} parent=15 // pred_fallthru
          _
        // Predicated region
        $region29: #{tpu_custom_call.1} parent=15 // pred_check
          %p526 = pneg %p144
        $region30: #{tpu_custom_call.1} parent=15 // pred_check_branch
          %528 = sbr.rel (%p526) target = $region32
        $region31: #{tpu_custom_call.1} parent=15 // pred_region
          %p529 = scmp.lt.s32.totalorder %s42, 1
          %s530 = scalar_select %p529, %s42, 1
          %s531 = smul.addr %s530, 4
          %s532 = smul.addr %s531, 4
          %s533 = scalar_lea.vmem %s3, %s532
        $region32: #{tpu_custom_call.1} parent=15 // pred_fallthru
          _
        // Predicated region
        $region33: #{tpu_custom_call.1} parent=15 // pred_check
          %p534 = pneg %p170
        $region34: #{tpu_custom_call.1} parent=15 // pred_check_branch
          %536 = sbr.rel (%p534) target = $region36
        $region35: #{tpu_custom_call.1} parent=15 // pred_region
          %p537 = scmp.lt.s32.totalorder %s42, 1
          %s538 = scalar_select %p537, %s42, 1
          %s539 = smul.addr %s538, 4
          %s540 = smul.addr %s539, 4
          %s541 = scalar_lea.vmem %s4, %s540
        $region36: #{tpu_custom_call.1} parent=15 // pred_fallthru
          _
        // Predicated region
        $region37: #{tpu_custom_call.1} parent=15 // pred_check
          %p542 = pneg %p196
        $region38: #{tpu_custom_call.1} parent=15 // pred_check_branch
          %544 = sbr.rel (%p542) target = $region40
        $region39: #{tpu_custom_call.1} parent=15 // pred_region
          %s545 = sand.u32 %s34, 1
          %s546 = scalar_lea.sflag [#allocation7], %s545
          %s547 = sand.u32 %s186, 1
          %s548 = smul.addr %s547, 16
          %s549 = scalar_lea.vmem [#allocation8], %s548
          %s551 = ssub.s32 256, 256
          %552 = vsyncadd %s546, %s551
          %s553 = smul.addr %s42, 4
          %s554 = smul.addr %s553, 64
          %s555 = scalar_lea.hbm %s5, %s554
          %s556 = sshll.u32 %s549, 4
          %s557 = int_to_ptr.vmem [resolvable:$true] %s556
          %562 = dma.hbm_to_vmem [thread:$0]  %s555, 256, %s557, %s546, 64, 64, 4
        $region40: #{tpu_custom_call.1} parent=15 // pred_fallthru
          _
        // Predicated region
        $region41: #{tpu_custom_call.1} parent=15 // pred_check
          %p563 = pneg %p222
        $region42: #{tpu_custom_call.1} parent=15 // pred_check_branch
          %565 = sbr.rel (%p563) target = $region44
        $region43: #{tpu_custom_call.1} parent=15 // pred_region
          %p566 = scmp.lt.s32.totalorder %s42, 1
          %s567 = scalar_select %p566, %s42, 1
          %s568 = scalar_lea.vmem %s6, %s567
        $region44: #{tpu_custom_call.1} parent=15 // pred_fallthru
          _
        // Predicated region
        $region45: #{tpu_custom_call.1} parent=15 // pred_check
          %p569 = pneg %p248
        $region46: #{tpu_custom_call.1} parent=15 // pred_check_branch
          %571 = sbr.rel (%p569) target = $region48
        $region47: #{tpu_custom_call.1} parent=15 // pred_region
          %p572 = scmp.lt.s32.totalorder %s42, 1
          %s573 = scalar_select %p572, %s42, 1
          %s574 = scalar_lea.vmem %s7, %s573
        $region48: #{tpu_custom_call.1} parent=15 // pred_fallthru
          _
        // Predicated region
        $region49: #{tpu_custom_call.1} parent=15 // pred_check
          %p575 = pneg %p274
        $region50: #{tpu_custom_call.1} parent=15 // pred_check_branch
          %577 = sbr.rel (%p575) target = $region52
        $region51: #{tpu_custom_call.1} parent=15 // pred_region
          %s578 = sand.u32 %s34, 1
          %s579 = scalar_lea.sflag [#allocation10], %s578
          %s580 = sand.u32 %s264, 1
          %s581 = smul.addr %s580, 16
          %s582 = scalar_lea.vmem [#allocation9], %s581
          %s584 = ssub.s32 256, 256
          %585 = vsyncadd %s579, %s584
          %s586 = smul.addr %s42, 4
          %s587 = smul.addr %s586, 64
          %s588 = scalar_lea.hbm %s8, %s587
          %s589 = sshll.u32 %s582, 4
          %s590 = int_to_ptr.vmem [resolvable:$true] %s589
          %595 = dma.hbm_to_vmem [thread:$0]  %s588, 256, %s590, %s579, 64, 64, 4
        $region52: #{tpu_custom_call.1} parent=15 // pred_fallthru
          _
        // Predicated region
        $region53: #{tpu_custom_call.1} parent=15 // pred_check
          %p596 = pneg %p300
        $region54: #{tpu_custom_call.1} parent=15 // pred_check_branch
          %598 = sbr.rel (%p596) target = $region56
        $region55: #{tpu_custom_call.1} parent=15 // pred_region
          %s599 = sand.u32 %s34, 1
          %s600 = scalar_lea.sflag [#allocation10], %s599
          %s601 = sand.u32 %s290, 1
          %s602 = scalar_lea.vmem [#allocation11], %s601
          %s604 = ssub.s32 16, 16
          %605 = vsyncadd %s600, %s604
          %s606 = smul.addr %s42, 16
          %s607 = scalar_lea.hbm %s9, %s606
          %s609 = sshll.u32 %s602, 4
          %s610 = int_to_ptr.vmem [resolvable:$true] %s609
          %612 = dma.hbm_to_vmem [thread:$0]  %s607, 16, %s610, %s600
        $region56: #{tpu_custom_call.1} parent=15 // pred_fallthru
          _
        // Predicated region
        $region57: #{tpu_custom_call.1} parent=15 // pred_check
          %p613 = pneg %p326
        $region58: #{tpu_custom_call.1} parent=15 // pred_check_branch
          %615 = sbr.rel (%p613) target = $region60
        $region59: #{tpu_custom_call.1} parent=15 // pred_region
          %p616 = scmp.lt.s32.totalorder %s42, 1
          %s617 = scalar_select %p616, %s42, 1
          %s618 = smul.addr %s617, 8
          %s619 = smul.addr %s618, 4
          %s620 = scalar_lea.vmem %s10, %s619
        $region60: #{tpu_custom_call.1} parent=15 // pred_fallthru
          _
        // Predicated region
        $region61: #{tpu_custom_call.1} parent=15 // pred_check
          %p621 = pneg %p352
        $region62: #{tpu_custom_call.1} parent=15 // pred_check_branch
          %623 = sbr.rel (%p621) target = $region64
        $region63: #{tpu_custom_call.1} parent=15 // pred_region
          %p624 = scmp.lt.s32.totalorder %s42, 1
          %s625 = scalar_select %p624, %s42, 1
          %s626 = scalar_lea.vmem %s11, %s625
        $region64: #{tpu_custom_call.1} parent=15 // pred_fallthru
          _
        // Predicated region
        $region65: #{tpu_custom_call.1} parent=15 // pred_check
          %p627 = pneg %p378
        $region66: #{tpu_custom_call.1} parent=15 // pred_check_branch
          %629 = sbr.rel (%p627) target = $region68
        $region67: #{tpu_custom_call.1} parent=15 // pred_region
          %p630 = scmp.lt.s32.totalorder %s42, 1
          %s631 = scalar_select %p630, %s42, 1
          %s632 = scalar_lea.vmem %s12, %s631
        $region68: #{tpu_custom_call.1} parent=15 // pred_fallthru
          _
        // Predicated region
        $region69: #{tpu_custom_call.1} parent=15 // pred_check
          %p633 = pneg %p404
        $region70: #{tpu_custom_call.1} parent=15 // pred_check_branch
          %635 = sbr.rel (%p633) target = $region72
        $region71: #{tpu_custom_call.1} parent=15 // pred_region
          %p636 = scmp.lt.s32.totalorder %s42, 1
          %s637 = scalar_select %p636, %s42, 1
          %s638 = scalar_lea.vmem %s13, %s637
        $region72: #{tpu_custom_call.1} parent=15 // pred_fallthru
          _
      $region16: #{tpu_custom_call.1} parent=5 // pred_fallthru
        _
      %p639 = scmp.le.s32.totalorder 1, %s34
      %p640 = scmp.lt.s32.totalorder %s34, 5
      %p641 = pnand %p639, %p640
      %p642 = pneg %p641
      // Predicated region
      $region73: #{tpu_custom_call.1} parent=5 // pred_check
        _
      $region74: #{tpu_custom_call.1} parent=5 // pred_check_branch
        %644 = sbr.rel (%p641) target = $region76
      $region75: #{tpu_custom_call.1} parent=5 // pred_region
        %s645 = ssub.s32 %s34, 1
        %s646 = sand.u32 %s59, 1
        %s647 = scalar_lea.sflag [#allocation4], %s646
        %s648 = sand.u32 %s59, 1
        %s649 = scalar_lea.vmem [#allocation3], %s648
        // Predicated region
        $region77: #{tpu_custom_call.1} parent=75 // pred_check
          %p650 = pneg %p72
        $region78: #{tpu_custom_call.1} parent=75 // pred_check_branch
          %652 = sbr.rel (%p650) target = $region80
        $region79: #{tpu_custom_call.1} parent=75 // pred_region
          %653 = dma.done %s647, 16
        $region80: #{tpu_custom_call.1} parent=75 // pred_fallthru
          _
        %s654 = sand.u32 %s39, 1
        %s655 = scalar_lea.sflag [#allocation7], %s654
        %s656 = sand.u32 %s85, 1
        %s657 = smul.addr %s656, 8
        %s658 = scalar_lea.vmem [#allocation6], %s657
        // Predicated region
        $region81: #{tpu_custom_call.1} parent=75 // pred_check
          %p659 = pneg %p98
        $region82: #{tpu_custom_call.1} parent=75 // pred_check_branch
          %661 = sbr.rel (%p659) target = $region84
        $region83: #{tpu_custom_call.1} parent=75 // pred_region
          %662 = dma.done %s655, 128
        $region84: #{tpu_custom_call.1} parent=75 // pred_fallthru
          _
        %s663 = sand.u32 %s39, 1
        %s664 = scalar_lea.sflag [#allocation7], %s663
        %s665 = sand.u32 %s189, 1
        %s666 = smul.addr %s665, 16
        %s667 = scalar_lea.vmem [#allocation8], %s666
        // Predicated region
        $region85: #{tpu_custom_call.1} parent=75 // pred_check
          %p668 = pneg %p202
        $region86: #{tpu_custom_call.1} parent=75 // pred_check_branch
          %670 = sbr.rel (%p668) target = $region88
        $region87: #{tpu_custom_call.1} parent=75 // pred_region
          %671 = dma.done %s664, 256
        $region88: #{tpu_custom_call.1} parent=75 // pred_fallthru
          _
        %s672 = sand.u32 %s39, 1
        %s673 = scalar_lea.sflag [#allocation10], %s672
        %s674 = sand.u32 %s267, 1
        %s675 = smul.addr %s674, 16
        %s676 = scalar_lea.vmem [#allocation9], %s675
        // Predicated region
        $region89: #{tpu_custom_call.1} parent=75 // pred_check
          %p677 = pneg %p280
        $region90: #{tpu_custom_call.1} parent=75 // pred_check_branch
          %679 = sbr.rel (%p677) target = $region92
        $region91: #{tpu_custom_call.1} parent=75 // pred_region
          %680 = dma.done %s673, 256
        $region92: #{tpu_custom_call.1} parent=75 // pred_fallthru
          _
        %s681 = sand.u32 %s39, 1
        %s682 = scalar_lea.sflag [#allocation10], %s681
        %s683 = sand.u32 %s293, 1
        %s684 = scalar_lea.vmem [#allocation11], %s683
        // Predicated region
        $region93: #{tpu_custom_call.1} parent=75 // pred_check
          %p685 = pneg %p306
        $region94: #{tpu_custom_call.1} parent=75 // pred_check_branch
          %687 = sbr.rel (%p685) target = $region96
        $region95: #{tpu_custom_call.1} parent=75 // pred_region
          %688 = dma.done %s682, 16
        $region96: #{tpu_custom_call.1} parent=75 // pred_fallthru
          _
        %s689 = sand.u32 %s59, 1
        %s690 = scalar_lea.sflag [#allocation4], %s689
        %s691 = sand.u32 %s59, 1
        %s692 = scalar_lea.vmem [#allocation3], %s691
        %p693 = pneg %p72
        %p694 = pneg %p69
        %s695 = sand.u32 %s39, 1
        %s696 = scalar_lea.sflag [#allocation7], %s695
        %s697 = sand.u32 %s85, 1
        %s698 = smul.addr %s697, 8
        %s699 = scalar_lea.vmem [#allocation6], %s698
        %p700 = pneg %p98
        %p701 = pneg %p95
        %p702 = scmp.lt.s32.totalorder %s44, 1
        %s703 = scalar_select %p702, %s44, 1
        %s704 = smul.addr %s703, 4
        %s705 = smul.addr %s704, 4
        %s706 = scalar_lea.vmem %s2, %s705
        %p707 = pneg %p124
        %p708 = pneg %p121
        %p709 = scmp.lt.s32.totalorder %s44, 1
        %s710 = scalar_select %p709, %s44, 1
        %s711 = smul.addr %s710, 4
        %s712 = smul.addr %s711, 4
        %s713 = scalar_lea.vmem %s3, %s712
        %p714 = pneg %p150
        %p715 = pneg %p147
        %p716 = scmp.lt.s32.totalorder %s44, 1
        %s717 = scalar_select %p716, %s44, 1
        %s718 = smul.addr %s717, 4
        %s719 = smul.addr %s718, 4
        %s720 = scalar_lea.vmem %s4, %s719
        %p721 = pneg %p176
        %p722 = pneg %p173
        %s723 = sand.u32 %s39, 1
        %s724 = scalar_lea.sflag [#allocation7], %s723
        %s725 = sand.u32 %s189, 1
        %s726 = smul.addr %s725, 16
        %s727 = scalar_lea.vmem [#allocation8], %s726
        %p728 = pneg %p202
        %p729 = pneg %p199
        %p730 = scmp.lt.s32.totalorder %s44, 1
        %s731 = scalar_select %p730, %s44, 1
        %s732 = scalar_lea.vmem %s6, %s731
        %p733 = pneg %p228
        %p734 = pneg %p225
        %p735 = scmp.lt.s32.totalorder %s44, 1
        %s736 = scalar_select %p735, %s44, 1
        %s737 = scalar_lea.vmem %s7, %s736
        %p738 = pneg %p254
        %p739 = pneg %p251
        %s740 = sand.u32 %s39, 1
        %s741 = scalar_lea.sflag [#allocation10], %s740
        %s742 = sand.u32 %s267, 1
        %s743 = smul.addr %s742, 16
        %s744 = scalar_lea.vmem [#allocation9], %s743
        %p745 = pneg %p280
        %p746 = pneg %p277
        %s747 = sand.u32 %s39, 1
        %s748 = scalar_lea.sflag [#allocation10], %s747
        %s749 = sand.u32 %s293, 1
        %s750 = scalar_lea.vmem [#allocation11], %s749
        %p751 = pneg %p306
        %p752 = pneg %p303
        %p753 = scmp.lt.s32.totalorder %s44, 1
        %s754 = scalar_select %p753, %s44, 1
        %s755 = smul.addr %s754, 8
        %s756 = smul.addr %s755, 4
        %s757 = scalar_lea.vmem %s10, %s756
        %p758 = pneg %p332
        %p759 = pneg %p329
        %p760 = scmp.lt.s32.totalorder %s44, 1
        %s761 = scalar_select %p760, %s44, 1
        %s762 = scalar_lea.vmem %s11, %s761
        %p763 = pneg %p358
        %p764 = pneg %p355
        %p765 = scmp.lt.s32.totalorder %s44, 1
        %s766 = scalar_select %p765, %s44, 1
        %s767 = scalar_lea.vmem %s12, %s766
        %p768 = pneg %p384
        %p769 = pneg %p381
        %p770 = scmp.lt.s32.totalorder %s44, 1
        %s771 = scalar_select %p770, %s44, 1
        %s772 = scalar_lea.vmem %s13, %s771
        %p773 = pneg %p410
        %p774 = pneg %p407
        %p775 = pneg %p436
        %p776 = pneg %p433
        %s777 = sand.u32 %s423, 1
        %s778 = scalar_lea.sflag [#allocation5], %s777
        %s779 = sand.u32 %s423, 1
        %s780 = smul.addr %s779, 8
        %s781 = scalar_lea.vmem [#allocation12], %s780
        %p782 = pneg %p464
        %p783 = pneg %p461
        %p784 = scmp.lt.s32.totalorder %s44, 1
        %s785 = scalar_select %p784, %s44, 1
        %p786 = scmp.lt.s32.totalorder %s43, 1
        %s787 = scalar_select %p786, %s43, 1
        %s788 = smul.addr %s787, 4
        %s789 = smul.addr %s785, 8
        %s790 = sadd.s32 %s788, %s789
        %s791 = smul.addr %s790, 8
        %s792 = scalar_lea.vmem %s15, %s791
        %p793 = scmp.lt.s32.totalorder %s44, 1
        %s794 = scalar_select %p793, %s44, 1
        %s795 = smul.addr %s794, 4
        %s796 = smul.addr %s795, 4
        %s797 = scalar_lea.vmem %s2, %s796
        %p798 = scmp.lt.s32.totalorder %s44, 1
        %s799 = scalar_select %p798, %s44, 1
        %s800 = smul.addr %s799, 4
        %s801 = smul.addr %s800, 4
        %s802 = scalar_lea.vmem %s3, %s801
        %p803 = scmp.lt.s32.totalorder %s44, 1
        %s804 = scalar_select %p803, %s44, 1
        %s805 = smul.addr %s804, 4
        %s806 = smul.addr %s805, 4
        %s807 = scalar_lea.vmem %s4, %s806
        %p808 = scmp.lt.s32.totalorder %s44, 1
        %s809 = scalar_select %p808, %s44, 1
        %s810 = scalar_lea.vmem %s6, %s809
        %p811 = scmp.lt.s32.totalorder %s44, 1
        %s812 = scalar_select %p811, %s44, 1
        %s813 = scalar_lea.vmem %s7, %s812
        %p814 = scmp.lt.s32.totalorder %s44, 1
        %s815 = scalar_select %p814, %s44, 1
        %s816 = smul.addr %s815, 8
        %s817 = smul.addr %s816, 4
        %s818 = scalar_lea.vmem %s10, %s817
        %p819 = scmp.lt.s32.totalorder %s44, 1
        %s820 = scalar_select %p819, %s44, 1
        %s821 = scalar_lea.vmem %s11, %s820
        %p822 = scmp.lt.s32.totalorder %s44, 1
        %s823 = scalar_select %p822, %s44, 1
        %s824 = scalar_lea.vmem %s12, %s823
        %p825 = scmp.lt.s32.totalorder %s44, 1
        %s826 = scalar_select %p825, %s44, 1
        %s827 = scalar_lea.vmem %s13, %s826
        %p828 = scmp.lt.s32.totalorder %s44, 1
        %s829 = scalar_select %p828, %s44, 1
        %p830 = scmp.lt.s32.totalorder %s43, 1
        %s831 = scalar_select %p830, %s43, 1
        %s832 = smul.addr %s831, 4
        %s833 = smul.addr %s829, 8
        %s834 = sadd.s32 %s832, %s833
        %s835 = smul.addr %s834, 8
        %s836 = scalar_lea.vmem %s15, %s835
        %p838 = scmp.eq.s32.totalorder %s44, 0
        // Predicated region
        $region97: #{tpu_custom_call.1} parent=75 // pred_check
          %p839 = pneg %p838
        $region98: #{tpu_custom_call.1} parent=75 // pred_check_branch
          %841 = sbr.rel (%p839) target = $region100
        $region99: #{tpu_custom_call.1} parent=75 // pred_region
          %v842 = vld [vmem:[%s658] sm:$0xff]
          %vm843 = vcmask 261120
          %844 = vst.msk [vmem:[#allocation2] sm:$0xff] %vm843, %v842
        $region100: #{tpu_custom_call.1} parent=75 // pred_fallthru
          _
        %v845 = vld [vmem:[#allocation2] sm:$0xff]
        %v846 = vpack.c.bf16 %v845, %v845
        %v847 = vlaneseq
        %v848 = vshrl.u32 %v847, 7
        %v849 = vlaneseq
        %v850 = vand.u32 %v849, 127
        %v851 = vld [vmem:[%s649] sm:$0x1]
        %vm852 = vcmp.gt.s32.totalorder %v850, %v848
        %vm853 = vcmp.gt.f32.partialorder %v851, 0.5
        %v854 = vsel %vm853, 1, 0
        %v855 = vlaneseq
        %v856 = vshrl.u32 %v855, 7
        %v857 = vsub.s32 0, %v856
        %v858 = vrot.slane %v854, %v857
        %vm859 = vcmp.eq.s32.totalorder %v858, 1
        %vm860 = vmor %vm852, %vm859
        %v861 = vsel %vm860, -1e+09, 0.0
        %v862 = vld [vmem:[%s797] sm:$0xf]
        %v863 = vld [vmem:[%s797 + $0x4] sm:$0xf]
        %v864 = vld [vmem:[%s797 + $0x8] sm:$0xf]
        %v865 = vld [vmem:[%s797 + $0xc] sm:$0xf]
        %v870 = vunpack.c.l.b16 %v862
        %v871 = vunpack.c.l.b16 %v863
        %v872 = vunpack.c.l.b16 %v864
        %v873 = vunpack.c.l.b16 %v865
        %v874 = vpack.c.b16 %v871, %v870
        %v875 = vpack.c.b16 %v873, %v872
        %vm878 = vcmask 261120
        %v880 = vsel %vm878, %v846, 0
        %882 = vmatprep.subr.bf16.mxu0 0
        %883 = vmatpush1.bf16.msra.mxu0 %v874
        %884 = vmatprep.subr.bf16.mxu0 0
        %885 = vmatpush1.bf16.msra.mxu0 %v875
        %886 = vmatprep.subr.bf16.mxu0 0
        %887 = vmatpush1.bf16.msra.mxu0 0
        %888 = vmatprep.subr.bf16.mxu0 0
        %889 = vmatpush1.bf16.msra.mxu0 0
        %890 = vmatprep.subr.bf16.mxu0 0
        %891 = vmatpush1.bf16.msra.mxu0 0
        %892 = vmatprep.subr.bf16.mxu0 0
        %893 = vmatpush1.bf16.msra.mxu0 0
        %894 = vmatprep.subr.bf16.mxu0 0
        %895 = vmatpush1.bf16.msra.mxu0 0
        %896 = vmatprep.subr.bf16.mxu0 0
        %897 = vmatpush1.bf16.msra.mxu0 0
        %898 = vmatprep.subr.bf16.mxu0 0
        %899 = vmatpush1.bf16.msra.mxu0 0
        %900 = vmatprep.subr.bf16.mxu0 0
        %901 = vmatpush1.bf16.msra.mxu0 0
        %902 = vmatprep.subr.bf16.mxu0 0
        %903 = vmatpush1.bf16.msra.mxu0 0
        %904 = vmatprep.subr.bf16.mxu0 0
        %905 = vmatpush1.bf16.msra.mxu0 0
        %906 = vmatprep.subr.bf16.mxu0 0
        %907 = vmatpush1.bf16.msra.mxu0 0
        %908 = vmatprep.subr.bf16.mxu0 0
        %909 = vmatpush1.bf16.msra.mxu0 0
        %910 = vmatprep.subr.bf16.mxu0 0
        %911 = vmatpush1.bf16.msra.mxu0 0
        %912 = vmatprep.subr.bf16.mxu0 0
        %913 = vmatpush1.bf16.msra.mxu0 0
        %914 = vmatprep.mubr.bf16.mxu0 0
        %915 = vmatmul.mubr.bf16.gmra.mrb[0].mxu0 %v880
        %v916 = vpop.f32.mrb[0].mxu0
        %v917 = vadd.f32 0.0, %v916
        %v918 = vpop.f32.mrb[0].mxu0
        %v919 = vpop.f32.mrb[0].mxu0
        %v920 = vpop.f32.mrb[0].mxu0
        %921 = vdwg.mxu0
        %v922 = vmul.f32 %v917, 0.35355338
        %v923 = vld [vmem:[%s802] sm:$0xf]
        %v924 = vld [vmem:[%s802 + $0x4] sm:$0xf]
        %v925 = vld [vmem:[%s802 + $0x8] sm:$0xf]
        %v926 = vld [vmem:[%s802 + $0xc] sm:$0xf]
        %v931 = vunpack.c.l.b16 %v923
        %v932 = vunpack.c.l.b16 %v924
        %v933 = vunpack.c.l.b16 %v925
        %v934 = vunpack.c.l.b16 %v926
        %v935 = vpack.c.b16 %v932, %v931
        %v936 = vpack.c.b16 %v934, %v933
        %939 = vmatprep.subr.bf16.mxu0 0
        %940 = vmatpush1.bf16.msra.mxu0 %v935
        %941 = vmatprep.subr.bf16.mxu0 0
        %942 = vmatpush1.bf16.msra.mxu0 %v936
        %943 = vmatprep.subr.bf16.mxu0 0
        %944 = vmatpush1.bf16.msra.mxu0 0
        %945 = vmatprep.subr.bf16.mxu0 0
        %946 = vmatpush1.bf16.msra.mxu0 0
        %947 = vmatprep.subr.bf16.mxu0 0
        %948 = vmatpush1.bf16.msra.mxu0 0
        %949 = vmatprep.subr.bf16.mxu0 0
        %950 = vmatpush1.bf16.msra.mxu0 0
        %951 = vmatprep.subr.bf16.mxu0 0
        %952 = vmatpush1.bf16.msra.mxu0 0
        %953 = vmatprep.subr.bf16.mxu0 0
        %954 = vmatpush1.bf16.msra.mxu0 0
        %955 = vmatprep.subr.bf16.mxu0 0
        %956 = vmatpush1.bf16.msra.mxu0 0
        %957 = vmatprep.subr.bf16.mxu0 0
        %958 = vmatpush1.bf16.msra.mxu0 0
        %959 = vmatprep.subr.bf16.mxu0 0
        %960 = vmatpush1.bf16.msra.mxu0 0
        %961 = vmatprep.subr.bf16.mxu0 0
        %962 = vmatpush1.bf16.msra.mxu0 0
        %963 = vmatprep.subr.bf16.mxu0 0
        %964 = vmatpush1.bf16.msra.mxu0 0
        %965 = vmatprep.subr.bf16.mxu0 0
        %966 = vmatpush1.bf16.msra.mxu0 0
        %967 = vmatprep.subr.bf16.mxu0 0
        %968 = vmatpush1.bf16.msra.mxu0 0
        %969 = vmatprep.subr.bf16.mxu0 0
        %970 = vmatpush1.bf16.msra.mxu0 0
        %971 = vmatprep.mubr.bf16.mxu0 0
        %972 = vmatmul.mubr.bf16.gmra.mrb[0].mxu0 %v880
        %v973 = vpop.f32.mrb[0].mxu0
        %v974 = vadd.f32 0.0, %v973
        %v975 = vpop.f32.mrb[0].mxu0
        %v976 = vpop.f32.mrb[0].mxu0
        %v977 = vpop.f32.mrb[0].mxu0
        %978 = vdwg.mxu0
        %v979 = vld [vmem:[%s807] sm:$0xf]
        %v980 = vld [vmem:[%s807 + $0x4] sm:$0xf]
        %v981 = vld [vmem:[%s807 + $0x8] sm:$0xf]
        %v982 = vld [vmem:[%s807 + $0xc] sm:$0xf]
        %v987 = vunpack.c.l.b16 %v979
        %v988 = vunpack.c.l.b16 %v980
        %v989 = vunpack.c.l.b16 %v981
        %v990 = vunpack.c.l.b16 %v982
        %v991 = vpack.c.b16 %v988, %v987
        %v992 = vpack.c.b16 %v990, %v989
        %995 = vmatprep.subr.bf16.mxu0 0
        %996 = vmatpush1.bf16.msra.mxu0 %v991
        %997 = vmatprep.subr.bf16.mxu0 0
        %998 = vmatpush1.bf16.msra.mxu0 %v992
        %999 = vmatprep.subr.bf16.mxu0 0
        %1000 = vmatpush1.bf16.msra.mxu0 0
        %1001 = vmatprep.subr.bf16.mxu0 0
        %1002 = vmatpush1.bf16.msra.mxu0 0
        %1003 = vmatprep.subr.bf16.mxu0 0
        %1004 = vmatpush1.bf16.msra.mxu0 0
        %1005 = vmatprep.subr.bf16.mxu0 0
        %1006 = vmatpush1.bf16.msra.mxu0 0
        %1007 = vmatprep.subr.bf16.mxu0 0
        %1008 = vmatpush1.bf16.msra.mxu0 0
        %1009 = vmatprep.subr.bf16.mxu0 0
        %1010 = vmatpush1.bf16.msra.mxu0 0
        %1011 = vmatprep.subr.bf16.mxu0 0
        %1012 = vmatpush1.bf16.msra.mxu0 0
        %1013 = vmatprep.subr.bf16.mxu0 0
        %1014 = vmatpush1.bf16.msra.mxu0 0
        %1015 = vmatprep.subr.bf16.mxu0 0
        %1016 = vmatpush1.bf16.msra.mxu0 0
        %1017 = vmatprep.subr.bf16.mxu0 0
        %1018 = vmatpush1.bf16.msra.mxu0 0
        %1019 = vmatprep.subr.bf16.mxu0 0
        %1020 = vmatpush1.bf16.msra.mxu0 0
        %1021 = vmatprep.subr.bf16.mxu0 0
        %1022 = vmatpush1.bf16.msra.mxu0 0
        %1023 = vmatprep.subr.bf16.mxu0 0
        %1024 = vmatpush1.bf16.msra.mxu0 0
        %1025 = vmatprep.subr.bf16.mxu0 0
        %1026 = vmatpush1.bf16.msra.mxu0 0
        %1027 = vmatprep.mubr.bf16.mxu0 0
        %1028 = vmatmul.mubr.bf16.gmra.mrb[0].mxu0 %v880
        %v1029 = vpop.f32.mrb[0].mxu0
        %v1030 = vadd.f32 0.0, %v1029
        %v1031 = vpop.f32.mrb[0].mxu0
        %v1032 = vpop.f32.mrb[0].mxu0
        %v1033 = vpop.f32.mrb[0].mxu0
        %1034 = vdwg.mxu0
        %v1035 = vpack.c.bf16 %v922, %v922
        %v1036 = vpack.c.bf16 %v974, %v974
        %v1037 = vpack.c.bf16 %v1030, %v1030
        %vm1038 = vcmask 64512
        %v1040 = vsel %vm1038, %v1035, 0
        %v1043 = vsel %vm1038, %v1036, 0
        %1045 = vmatprep.subr.bf16.mxu0 0
        %1046 = vmatpush1.bf16.xpose.msra.mxu0 %v1043
        %1047 = vmatprep.subr.bf16.mxu0 0
        %1048 = vmatpush1.bf16.xpose.msra.mxu0 0
        %1049 = vmatprep.subr.bf16.mxu0 0
        %1050 = vmatpush1.bf16.xpose.msra.mxu0 0
        %1051 = vmatprep.subr.bf16.mxu0 0
        %1052 = vmatpush1.bf16.xpose.msra.mxu0 0
        %1053 = vmatprep.subr.bf16.mxu0 0
        %1054 = vmatpush1.bf16.xpose.msra.mxu0 0
        %1055 = vmatprep.subr.bf16.mxu0 0
        %1056 = vmatpush1.bf16.xpose.msra.mxu0 0
        %1057 = vmatprep.subr.bf16.mxu0 0
        %1058 = vmatpush1.bf16.xpose.msra.mxu0 0
        %1059 = vmatprep.subr.bf16.mxu0 0
        %1060 = vmatpush1.bf16.xpose.msra.mxu0 0
        %1061 = vmatprep.subr.bf16.mxu0 0
        %1062 = vmatpush1.bf16.xpose.msra.mxu0 0
        %1063 = vmatprep.subr.bf16.mxu0 0
        %1064 = vmatpush1.bf16.xpose.msra.mxu0 0
        %1065 = vmatprep.subr.bf16.mxu0 0
        %1066 = vmatpush1.bf16.xpose.msra.mxu0 0
        %1067 = vmatprep.subr.bf16.mxu0 0
        %1068 = vmatpush1.bf16.xpose.msra.mxu0 0
        %1069 = vmatprep.subr.bf16.mxu0 0
        %1070 = vmatpush1.bf16.xpose.msra.mxu0 0
        %1071 = vmatprep.subr.bf16.mxu0 0
        %1072 = vmatpush1.bf16.xpose.msra.mxu0 0
        %1073 = vmatprep.subr.bf16.mxu0 0
        %1074 = vmatpush1.bf16.xpose.msra.mxu0 0
        %1075 = vmatprep.subr.bf16.mxu0 0
        %1076 = vmatpush1.bf16.xpose.msra.mxu0 0
        %1077 = vmatprep.mubr.bf16.mxu0 0
        %1078 = vmatmul.mubr.bf16.gmra.mrb[0].mxu0 %v1040
        %v1079 = vpop.f32.mrb[0].mxu0
        %v1080 = vadd.f32 %v861, %v1079
        %v1081 = vpop.f32.mrb[0].mxu0
        %v1082 = vpop.f32.mrb[0].mxu0
        %v1083 = vpop.f32.mrb[0].mxu0
        %1084 = vdwg.mxu0
        %v1085 = vsel %vm1038, %v1080, -inf
        %1086 = vmax.xlane.f32.xlu0 %v1085
        %v1087 = vpop.xlane.xlu0 %1086
        %v1088 = vsub.f32 %v1080, %v1087
        %v1089 = vmul.f32 %v1088, 1.442695
        %v1090 = vpow.pop %v1089
        %v1091 = vsel %vm1038, %v1090, 0.0
        %1092 = vadd.xlane.f32.xlu0 %v1091
        %v1093 = vpop.xlane.xlu0 %1092
        %v1094 = vrcp.pop %v1093
        %v1095 = vmul.f32 %v1090, %v1094
        %v1096 = vpack.c.bf16 %v1095, %v1095
        %v1098 = vsel %vm1038, %v1096, 0
        %vm1100 = vcmask 1043456
        %v1102 = vsel %vm1100, %v1037, 0
        %1104 = vmatprep.subr.bf16.mxu0 0
        %1105 = vmatpush1.bf16.msra.mxu0 %v1102
        %1106 = vmatprep.subr.bf16.mxu0 0
        %1107 = vmatpush1.bf16.msra.mxu0 0
        %1108 = vmatprep.subr.bf16.mxu0 0
        %1109 = vmatpush1.bf16.msra.mxu0 0
        %1110 = vmatprep.subr.bf16.mxu0 0
        %1111 = vmatpush1.bf16.msra.mxu0 0
        %1112 = vmatprep.subr.bf16.mxu0 0
        %1113 = vmatpush1.bf16.msra.mxu0 0
        %1114 = vmatprep.subr.bf16.mxu0 0
        %1115 = vmatpush1.bf16.msra.mxu0 0
        %1116 = vmatprep.subr.bf16.mxu0 0
        %1117 = vmatpush1.bf16.msra.mxu0 0
        %1118 = vmatprep.subr.bf16.mxu0 0
        %1119 = vmatpush1.bf16.msra.mxu0 0
        %1120 = vmatprep.subr.bf16.mxu0 0
        %1121 = vmatpush1.bf16.msra.mxu0 0
        %1122 = vmatprep.subr.bf16.mxu0 0
        %1123 = vmatpush1.bf16.msra.mxu0 0
        %1124 = vmatprep.subr.bf16.mxu0 0
        %1125 = vmatpush1.bf16.msra.mxu0 0
        %1126 = vmatprep.subr.bf16.mxu0 0
        %1127 = vmatpush1.bf16.msra.mxu0 0
        %1128 = vmatprep.subr.bf16.mxu0 0
        %1129 = vmatpush1.bf16.msra.mxu0 0
        %1130 = vmatprep.subr.bf16.mxu0 0
        %1131 = vmatpush1.bf16.msra.mxu0 0
        %1132 = vmatprep.subr.bf16.mxu0 0
        %1133 = vmatpush1.bf16.msra.mxu0 0
        %1134 = vmatprep.subr.bf16.mxu0 0
        %1135 = vmatpush1.bf16.msra.mxu0 0
        %1136 = vmatprep.mubr.bf16.mxu0 0
        %1137 = vmatmul.mubr.bf16.gmra.mrb[0].mxu0 %v1098
        %v1138 = vpop.f32.mrb[0].mxu0
        %v1139 = vadd.f32 0.0, %v1138
        %v1140 = vpop.f32.mrb[0].mxu0
        %v1141 = vpop.f32.mrb[0].mxu0
        %v1142 = vpop.f32.mrb[0].mxu0
        %1143 = vdwg.mxu0
        %1145 = vrot.lane.b32.xlu0 %v1035, 120
        %v1146 = vpop.permute.xlu0 %1145
        %1148 = vrot.lane.b32.xlu0 %v1036, 120
        %v1149 = vpop.permute.xlu0 %1148
        %v1151 = vsel %vm1038, %v1146, 0
        %v1154 = vsel %vm1038, %v1149, 0
        %1156 = vmatprep.subr.bf16.mxu0 0
        %1157 = vmatpush1.bf16.xpose.msra.mxu0 %v1154
        %1158 = vmatprep.subr.bf16.mxu0 0
        %1159 = vmatpush1.bf16.xpose.msra.mxu0 0
        %1160 = vmatprep.subr.bf16.mxu0 0
        %1161 = vmatpush1.bf16.xpose.msra.mxu0 0
        %1162 = vmatprep.subr.bf16.mxu0 0
        %1163 = vmatpush1.bf16.xpose.msra.mxu0 0
        %1164 = vmatprep.subr.bf16.mxu0 0
        %1165 = vmatpush1.bf16.xpose.msra.mxu0 0
        %1166 = vmatprep.subr.bf16.mxu0 0
        %1167 = vmatpush1.bf16.xpose.msra.mxu0 0
        %1168 = vmatprep.subr.bf16.mxu0 0
        %1169 = vmatpush1.bf16.xpose.msra.mxu0 0
        %1170 = vmatprep.subr.bf16.mxu0 0
        %1171 = vmatpush1.bf16.xpose.msra.mxu0 0
        %1172 = vmatprep.subr.bf16.mxu0 0
        %1173 = vmatpush1.bf16.xpose.msra.mxu0 0
        %1174 = vmatprep.subr.bf16.mxu0 0
        %1175 = vmatpush1.bf16.xpose.msra.mxu0 0
        %1176 = vmatprep.subr.bf16.mxu0 0
        %1177 = vmatpush1.bf16.xpose.msra.mxu0 0
        %1178 = vmatprep.subr.bf16.mxu0 0
        %1179 = vmatpush1.bf16.xpose.msra.mxu0 0
        %1180 = vmatprep.subr.bf16.mxu0 0
        %1181 = vmatpush1.bf16.xpose.msra.mxu0 0
        %1182 = vmatprep.subr.bf16.mxu0 0
        %1183 = vmatpush1.bf16.xpose.msra.mxu0 0
        %1184 = vmatprep.subr.bf16.mxu0 0
        %1185 = vmatpush1.bf16.xpose.msra.mxu0 0
        %1186 = vmatprep.subr.bf16.mxu0 0
        %1187 = vmatpush1.bf16.xpose.msra.mxu0 0
        %1188 = vmatprep.mubr.bf16.mxu0 0
        %1189 = vmatmul.mubr.bf16.gmra.mrb[0].mxu0 %v1151
        %v1190 = vpop.f32.mrb[0].mxu0
        %v1191 = vadd.f32 %v861, %v1190
        %v1192 = vpop.f32.mrb[0].mxu0
        %v1193 = vpop.f32.mrb[0].mxu0
        %v1194 = vpop.f32.mrb[0].mxu0
        %1195 = vdwg.mxu0
        %v1196 = vsel %vm1038, %v1191, -inf
        %1197 = vmax.xlane.f32.xlu0 %v1196
        %v1198 = vpop.xlane.xlu0 %1197
        %v1199 = vsub.f32 %v1191, %v1198
        %v1200 = vmul.f32 %v1199, 1.442695
        %v1201 = vpow.pop %v1200
        %v1202 = vsel %vm1038, %v1201, 0.0
        %1203 = vadd.xlane.f32.xlu0 %v1202
        %v1204 = vpop.xlane.xlu0 %1203
        %v1205 = vrcp.pop %v1204
        %v1206 = vmul.f32 %v1201, %v1205
        %v1207 = vpack.c.bf16 %v1206, %v1206
        %1209 = vrot.lane.b32.xlu0 %v1037, 120
        %v1210 = vpop.permute.xlu0 %1209
        %v1212 = vsel %vm1038, %v1207, 0
        %v1215 = vsel %vm1100, %v1210, 0
        %1217 = vmatprep.subr.bf16.mxu0 0
        %1218 = vmatpush1.bf16.msra.mxu0 %v1215
        %1219 = vmatprep.subr.bf16.mxu0 0
        %1220 = vmatpush1.bf16.msra.mxu0 0
        %1221 = vmatprep.subr.bf16.mxu0 0
        %1222 = vmatpush1.bf16.msra.mxu0 0
        %1223 = vmatprep.subr.bf16.mxu0 0
        %1224 = vmatpush1.bf16.msra.mxu0 0
        %1225 = vmatprep.subr.bf16.mxu0 0
        %1226 = vmatpush1.bf16.msra.mxu0 0
        %1227 = vmatprep.subr.bf16.mxu0 0
        %1228 = vmatpush1.bf16.msra.mxu0 0
        %1229 = vmatprep.subr.bf16.mxu0 0
        %1230 = vmatpush1.bf16.msra.mxu0 0
        %1231 = vmatprep.subr.bf16.mxu0 0
        %1232 = vmatpush1.bf16.msra.mxu0 0
        %1233 = vmatprep.subr.bf16.mxu0 0
        %1234 = vmatpush1.bf16.msra.mxu0 0
        %1235 = vmatprep.subr.bf16.mxu0 0
        %1236 = vmatpush1.bf16.msra.mxu0 0
        %1237 = vmatprep.subr.bf16.mxu0 0
        %1238 = vmatpush1.bf16.msra.mxu0 0
        %1239 = vmatprep.subr.bf16.mxu0 0
        %1240 = vmatpush1.bf16.msra.mxu0 0
        %1241 = vmatprep.subr.bf16.mxu0 0
        %1242 = vmatpush1.bf16.msra.mxu0 0
        %1243 = vmatprep.subr.bf16.mxu0 0
        %1244 = vmatpush1.bf16.msra.mxu0 0
        %1245 = vmatprep.subr.bf16.mxu0 0
        %1246 = vmatpush1.bf16.msra.mxu0 0
        %1247 = vmatprep.subr.bf16.mxu0 0
        %1248 = vmatpush1.bf16.msra.mxu0 0
        %1249 = vmatprep.mubr.bf16.mxu0 0
        %1250 = vmatmul.mubr.bf16.gmra.mrb[0].mxu0 %v1212
        %v1251 = vpop.f32.mrb[0].mxu0
        %v1252 = vadd.f32 0.0, %v1251
        %v1253 = vpop.f32.mrb[0].mxu0
        %v1254 = vpop.f32.mrb[0].mxu0
        %v1255 = vpop.f32.mrb[0].mxu0
        %1256 = vdwg.mxu0
        %1257 = vrot.lane.b32.xlu0 %v1035, 112
        %v1258 = vpop.permute.xlu0 %1257
        %1259 = vrot.lane.b32.xlu0 %v1036, 112
        %v1260 = vpop.permute.xlu0 %1259
        %v1262 = vsel %vm1038, %v1258, 0
        %v1265 = vsel %vm1038, %v1260, 0
        %1267 = vmatprep.subr.bf16.mxu0 0
        %1268 = vmatpush1.bf16.xpose.msra.mxu0 %v1265
        %1269 = vmatprep.subr.bf16.mxu0 0
        %1270 = vmatpush1.bf16.xpose.msra.mxu0 0
        %1271 = vmatprep.subr.bf16.mxu0 0
        %1272 = vmatpush1.bf16.xpose.msra.mxu0 0
        %1273 = vmatprep.subr.bf16.mxu0 0
        %1274 = vmatpush1.bf16.xpose.msra.mxu0 0
        %1275 = vmatprep.subr.bf16.mxu0 0
        %1276 = vmatpush1.bf16.xpose.msra.mxu0 0
        %1277 = vmatprep.subr.bf16.mxu0 0
        %1278 = vmatpush1.bf16.xpose.msra.mxu0 0
        %1279 = vmatprep.subr.bf16.mxu0 0
        %1280 = vmatpush1.bf16.xpose.msra.mxu0 0
        %1281 = vmatprep.subr.bf16.mxu0 0
        %1282 = vmatpush1.bf16.xpose.msra.mxu0 0
        %1283 = vmatprep.subr.bf16.mxu0 0
        %1284 = vmatpush1.bf16.xpose.msra.mxu0 0
        %1285 = vmatprep.subr.bf16.mxu0 0
        %1286 = vmatpush1.bf16.xpose.msra.mxu0 0
        %1287 = vmatprep.subr.bf16.mxu0 0
        %1288 = vmatpush1.bf16.xpose.msra.mxu0 0
        %1289 = vmatprep.subr.bf16.mxu0 0
        %1290 = vmatpush1.bf16.xpose.msra.mxu0 0
        %1291 = vmatprep.subr.bf16.mxu0 0
        %1292 = vmatpush1.bf16.xpose.msra.mxu0 0
        %1293 = vmatprep.subr.bf16.mxu0 0
        %1294 = vmatpush1.bf16.xpose.msra.mxu0 0
        %1295 = vmatprep.subr.bf16.mxu0 0
        %1296 = vmatpush1.bf16.xpose.msra.mxu0 0
        %1297 = vmatprep.subr.bf16.mxu0 0
        %1298 = vmatpush1.bf16.xpose.msra.mxu0 0
        %1299 = vmatprep.mubr.bf16.mxu0 0
        %1300 = vmatmul.mubr.bf16.gmra.mrb[0].mxu0 %v1262
        %v1301 = vpop.f32.mrb[0].mxu0
        %v1302 = vadd.f32 %v861, %v1301
        %v1303 = vpop.f32.mrb[0].mxu0
        %v1304 = vpop.f32.mrb[0].mxu0
        %v1305 = vpop.f32.mrb[0].mxu0
        %1306 = vdwg.mxu0
        %v1307 = vsel %vm1038, %v1302, -inf
        %1308 = vmax.xlane.f32.xlu0 %v1307
        %v1309 = vpop.xlane.xlu0 %1308
        %v1310 = vsub.f32 %v1302, %v1309
        %v1311 = vmul.f32 %v1310, 1.442695
        %v1312 = vpow.pop %v1311
        %v1313 = vsel %vm1038, %v1312, 0.0
        %1314 = vadd.xlane.f32.xlu0 %v1313
        %v1315 = vpop.xlane.xlu0 %1314
        %v1316 = vrcp.pop %v1315
        %v1317 = vmul.f32 %v1312, %v1316
        %v1318 = vpack.c.bf16 %v1317, %v1317
        %1319 = vrot.lane.b32.xlu0 %v1037, 112
        %v1320 = vpop.permute.xlu0 %1319
        %v1322 = vsel %vm1038, %v1318, 0
        %v1325 = vsel %vm1100, %v1320, 0
        %1327 = vmatprep.subr.bf16.mxu0 0
        %1328 = vmatpush1.bf16.msra.mxu0 %v1325
        %1329 = vmatprep.subr.bf16.mxu0 0
        %1330 = vmatpush1.bf16.msra.mxu0 0
        %1331 = vmatprep.subr.bf16.mxu0 0
        %1332 = vmatpush1.bf16.msra.mxu0 0
        %1333 = vmatprep.subr.bf16.mxu0 0
        %1334 = vmatpush1.bf16.msra.mxu0 0
        %1335 = vmatprep.subr.bf16.mxu0 0
        %1336 = vmatpush1.bf16.msra.mxu0 0
        %1337 = vmatprep.subr.bf16.mxu0 0
        %1338 = vmatpush1.bf16.msra.mxu0 0
        %1339 = vmatprep.subr.bf16.mxu0 0
        %1340 = vmatpush1.bf16.msra.mxu0 0
        %1341 = vmatprep.subr.bf16.mxu0 0
        %1342 = vmatpush1.bf16.msra.mxu0 0
        %1343 = vmatprep.subr.bf16.mxu0 0
        %1344 = vmatpush1.bf16.msra.mxu0 0
        %1345 = vmatprep.subr.bf16.mxu0 0
        %1346 = vmatpush1.bf16.msra.mxu0 0
        %1347 = vmatprep.subr.bf16.mxu0 0
        %1348 = vmatpush1.bf16.msra.mxu0 0
        %1349 = vmatprep.subr.bf16.mxu0 0
        %1350 = vmatpush1.bf16.msra.mxu0 0
        %1351 = vmatprep.subr.bf16.mxu0 0
        %1352 = vmatpush1.bf16.msra.mxu0 0
        %1353 = vmatprep.subr.bf16.mxu0 0
        %1354 = vmatpush1.bf16.msra.mxu0 0
        %1355 = vmatprep.subr.bf16.mxu0 0
        %1356 = vmatpush1.bf16.msra.mxu0 0
        %1357 = vmatprep.subr.bf16.mxu0 0
        %1358 = vmatpush1.bf16.msra.mxu0 0
        %1359 = vmatprep.mubr.bf16.mxu0 0
        %1360 = vmatmul.mubr.bf16.gmra.mrb[0].mxu0 %v1322
        %v1361 = vpop.f32.mrb[0].mxu0
        %v1362 = vadd.f32 0.0, %v1361
        %v1363 = vpop.f32.mrb[0].mxu0
        %v1364 = vpop.f32.mrb[0].mxu0
        %v1365 = vpop.f32.mrb[0].mxu0
        %1366 = vdwg.mxu0
        %1367 = vrot.lane.b32.xlu0 %v1035, 104
        %v1368 = vpop.permute.xlu0 %1367
        %1369 = vrot.lane.b32.xlu0 %v1036, 104
        %v1370 = vpop.permute.xlu0 %1369
        %v1372 = vsel %vm1038, %v1368, 0
        %v1375 = vsel %vm1038, %v1370, 0
        %1377 = vmatprep.subr.bf16.mxu0 0
        %1378 = vmatpush1.bf16.xpose.msra.mxu0 %v1375
        %1379 = vmatprep.subr.bf16.mxu0 0
        %1380 = vmatpush1.bf16.xpose.msra.mxu0 0
        %1381 = vmatprep.subr.bf16.mxu0 0
        %1382 = vmatpush1.bf16.xpose.msra.mxu0 0
        %1383 = vmatprep.subr.bf16.mxu0 0
        %1384 = vmatpush1.bf16.xpose.msra.mxu0 0
        %1385 = vmatprep.subr.bf16.mxu0 0
        %1386 = vmatpush1.bf16.xpose.msra.mxu0 0
        %1387 = vmatprep.subr.bf16.mxu0 0
        %1388 = vmatpush1.bf16.xpose.msra.mxu0 0
        %1389 = vmatprep.subr.bf16.mxu0 0
        %1390 = vmatpush1.bf16.xpose.msra.mxu0 0
        %1391 = vmatprep.subr.bf16.mxu0 0
        %1392 = vmatpush1.bf16.xpose.msra.mxu0 0
        %1393 = vmatprep.subr.bf16.mxu0 0
        %1394 = vmatpush1.bf16.xpose.msra.mxu0 0
        %1395 = vmatprep.subr.bf16.mxu0 0
        %1396 = vmatpush1.bf16.xpose.msra.mxu0 0
        %1397 = vmatprep.subr.bf16.mxu0 0
        %1398 = vmatpush1.bf16.xpose.msra.mxu0 0
        %1399 = vmatprep.subr.bf16.mxu0 0
        %1400 = vmatpush1.bf16.xpose.msra.mxu0 0
        %1401 = vmatprep.subr.bf16.mxu0 0
        %1402 = vmatpush1.bf16.xpose.msra.mxu0 0
        %1403 = vmatprep.subr.bf16.mxu0 0
        %1404 = vmatpush1.bf16.xpose.msra.mxu0 0
        %1405 = vmatprep.subr.bf16.mxu0 0
        %1406 = vmatpush1.bf16.xpose.msra.mxu0 0
        %1407 = vmatprep.subr.bf16.mxu0 0
        %1408 = vmatpush1.bf16.xpose.msra.mxu0 0
        %1409 = vmatprep.mubr.bf16.mxu0 0
        %1410 = vmatmul.mubr.bf16.gmra.mrb[0].mxu0 %v1372
        %v1411 = vpop.f32.mrb[0].mxu0
        %v1412 = vadd.f32 %v861, %v1411
        %v1413 = vpop.f32.mrb[0].mxu0
        %v1414 = vpop.f32.mrb[0].mxu0
        %v1415 = vpop.f32.mrb[0].mxu0
        %1416 = vdwg.mxu0
        %v1417 = vsel %vm1038, %v1412, -inf
        %1418 = vmax.xlane.f32.xlu0 %v1417
        %v1419 = vpop.xlane.xlu0 %1418
        %v1420 = vsub.f32 %v1412, %v1419
        %v1421 = vmul.f32 %v1420, 1.442695
        %v1422 = vpow.pop %v1421
        %v1423 = vsel %vm1038, %v1422, 0.0
        %1424 = vadd.xlane.f32.xlu0 %v1423
        %v1425 = vpop.xlane.xlu0 %1424
        %v1426 = vrcp.pop %v1425
        %v1427 = vmul.f32 %v1422, %v1426
        %v1428 = vpack.c.bf16 %v1427, %v1427
        %1429 = vrot.lane.b32.xlu0 %v1037, 104
        %v1430 = vpop.permute.xlu0 %1429
        %v1432 = vsel %vm1038, %v1428, 0
        %v1435 = vsel %vm1100, %v1430, 0
        %1437 = vmatprep.subr.bf16.mxu0 0
        %1438 = vmatpush1.bf16.msra.mxu0 %v1435
        %1439 = vmatprep.subr.bf16.mxu0 0
        %1440 = vmatpush1.bf16.msra.mxu0 0
        %1441 = vmatprep.subr.bf16.mxu0 0
        %1442 = vmatpush1.bf16.msra.mxu0 0
        %1443 = vmatprep.subr.bf16.mxu0 0
        %1444 = vmatpush1.bf16.msra.mxu0 0
        %1445 = vmatprep.subr.bf16.mxu0 0
        %1446 = vmatpush1.bf16.msra.mxu0 0
        %1447 = vmatprep.subr.bf16.mxu0 0
        %1448 = vmatpush1.bf16.msra.mxu0 0
        %1449 = vmatprep.subr.bf16.mxu0 0
        %1450 = vmatpush1.bf16.msra.mxu0 0
        %1451 = vmatprep.subr.bf16.mxu0 0
        %1452 = vmatpush1.bf16.msra.mxu0 0
        %1453 = vmatprep.subr.bf16.mxu0 0
        %1454 = vmatpush1.bf16.msra.mxu0 0
        %1455 = vmatprep.subr.bf16.mxu0 0
        %1456 = vmatpush1.bf16.msra.mxu0 0
        %1457 = vmatprep.subr.bf16.mxu0 0
        %1458 = vmatpush1.bf16.msra.mxu0 0
        %1459 = vmatprep.subr.bf16.mxu0 0
        %1460 = vmatpush1.bf16.msra.mxu0 0
        %1461 = vmatprep.subr.bf16.mxu0 0
        %1462 = vmatpush1.bf16.msra.mxu0 0
        %1463 = vmatprep.subr.bf16.mxu0 0
        %1464 = vmatpush1.bf16.msra.mxu0 0
        %1465 = vmatprep.subr.bf16.mxu0 0
        %1466 = vmatpush1.bf16.msra.mxu0 0
        %1467 = vmatprep.subr.bf16.mxu0 0
        %1468 = vmatpush1.bf16.msra.mxu0 0
        %1469 = vmatprep.mubr.bf16.mxu0 0
        %1470 = vmatmul.mubr.bf16.gmra.mrb[0].mxu0 %v1432
        %v1471 = vpop.f32.mrb[0].mxu0
        %v1472 = vadd.f32 0.0, %v1471
        %v1473 = vpop.f32.mrb[0].mxu0
        %v1474 = vpop.f32.mrb[0].mxu0
        %v1475 = vpop.f32.mrb[0].mxu0
        %1476 = vdwg.mxu0
        %1477 = vst.msk [vmem:[%s836] sm:$0xff] %vm1038, %v1095
        %1478 = vst.msk [vmem:[%s836 + $0x8] sm:$0xff] %vm1038, %v1206
        %1479 = vst.msk [vmem:[%s836 + $0x10] sm:$0xff] %vm1038, %v1317
        %1480 = vst.msk [vmem:[%s836 + $0x18] sm:$0xff] %vm1038, %v1427
        %1482 = vrot.lane.b32.xlu0 %v1252, 8
        %v1483 = vpop.permute.xlu0 %1482
        %1486 = vrot.lane.b32.xlu0 %v1362, 16
        %v1487 = vpop.permute.xlu0 %1486
        %1490 = vrot.lane.b32.xlu0 %v1472, 24
        %v1491 = vpop.permute.xlu0 %1490
        %v1493 = vsel %vm1038, %v1139, %v1483
        %vm1494 = vcmask 130048
        %v1495 = vsel %vm1494, %v1493, %v1487
        %vm1496 = vcmask 195584
        %v1497 = vsel %vm1496, %v1495, %v1491
        %v1498 = vpack.c.bf16 %v1497, %v1497
        %v1499 = vld [vmem:[%s667] sm:$0xf]
        %v1500 = vld [vmem:[%s667 + $0x4] sm:$0xf]
        %v1501 = vld [vmem:[%s667 + $0x8] sm:$0xf]
        %v1502 = vld [vmem:[%s667 + $0xc] sm:$0xf]
        %v1507 = vunpack.c.l.b16 %v1499
        %v1508 = vunpack.c.l.b16 %v1500
        %v1509 = vunpack.c.l.b16 %v1501
        %v1510 = vunpack.c.l.b16 %v1502
        %v1511 = vpack.c.b16 %v1508, %v1507
        %v1512 = vpack.c.b16 %v1510, %v1509
        %v1516 = vsel %vm878, %v1498, 0
        %1518 = vmatprep.subr.bf16.mxu0 0
        %1519 = vmatpush1.bf16.msra.mxu0 %v1511
        %1520 = vmatprep.subr.bf16.mxu0 0
        %1521 = vmatpush1.bf16.msra.mxu0 %v1512
        %1522 = vmatprep.subr.bf16.mxu0 0
        %1523 = vmatpush1.bf16.msra.mxu0 0
        %1524 = vmatprep.subr.bf16.mxu0 0
        %1525 = vmatpush1.bf16.msra.mxu0 0
        %1526 = vmatprep.subr.bf16.mxu0 0
        %1527 = vmatpush1.bf16.msra.mxu0 0
        %1528 = vmatprep.subr.bf16.mxu0 0
        %1529 = vmatpush1.bf16.msra.mxu0 0
        %1530 = vmatprep.subr.bf16.mxu0 0
        %1531 = vmatpush1.bf16.msra.mxu0 0
        %1532 = vmatprep.subr.bf16.mxu0 0
        %1533 = vmatpush1.bf16.msra.mxu0 0
        %1534 = vmatprep.subr.bf16.mxu0 0
        %1535 = vmatpush1.bf16.msra.mxu0 0
        %1536 = vmatprep.subr.bf16.mxu0 0
        %1537 = vmatpush1.bf16.msra.mxu0 0
        %1538 = vmatprep.subr.bf16.mxu0 0
        %1539 = vmatpush1.bf16.msra.mxu0 0
        %1540 = vmatprep.subr.bf16.mxu0 0
        %1541 = vmatpush1.bf16.msra.mxu0 0
        %1542 = vmatprep.subr.bf16.mxu0 0
        %1543 = vmatpush1.bf16.msra.mxu0 0
        %1544 = vmatprep.subr.bf16.mxu0 0
        %1545 = vmatpush1.bf16.msra.mxu0 0
        %1546 = vmatprep.subr.bf16.mxu0 0
        %1547 = vmatpush1.bf16.msra.mxu0 0
        %1548 = vmatprep.subr.bf16.mxu0 0
        %1549 = vmatpush1.bf16.msra.mxu0 0
        %1550 = vmatprep.mubr.bf16.mxu0 0
        %1551 = vmatmul.mubr.bf16.gmra.mrb[0].mxu0 %v1516
        %v1552 = vpop.f32.mrb[0].mxu0
        %v1553 = vadd.f32 %v845, %v1552
        %v1554 = vpop.f32.mrb[0].mxu0
        %v1555 = vpop.f32.mrb[0].mxu0
        %v1556 = vpop.f32.mrb[0].mxu0
        %1557 = vdwg.mxu0
        %v1558 = vld [vmem:[%s810] sm:$0x1]
        %v1559 = vld [vmem:[%s813] sm:$0x1]
        %v1560 = vsel %vm878, %v1553, 0.0
        %1561 = vadd.xlane.f32.xlu0 %v1560
        %v1562 = vpop.xlane.xlu0 %1561
        %v1563 = vrcp.pop 32.0
        %v1564 = vmul.f32 %v1562, %v1563
        %v1565 = vsub.f32 %v1553, %v1564
        %v1566 = vmul.f32 %v1565, %v1565
        %v1567 = vsel %vm878, %v1566, 0.0
        %1568 = vadd.xlane.f32.xlu0 %v1567
        %v1569 = vpop.xlane.xlu0 %1568
        %v1570 = vmul.f32 %v1569, %v1563
        %v1571 = vadd.f32 %v1570, 1e-05
        %v1572 = vrsqrt.pop %v1571
        %v1573 = vmul.f32 %v1565, %v1572
        %v1575 = vlaneseq
        %v1576 = vshrl.u32 %v1575, 7
        %v1577 = vsub.s32 0, %v1576
        %v1578 = vrot.slane %v1558, %v1577
        %v1580 = vmul.f32 %v1573, %v1578
        %v1582 = vlaneseq
        %v1583 = vshrl.u32 %v1582, 7
        %v1584 = vsub.s32 0, %v1583
        %v1585 = vrot.slane %v1559, %v1584
        %v1587 = vadd.f32 %v1580, %v1585
        %v1588 = vpack.c.bf16 %v1587, %v1587
        %v1589 = vld [vmem:[%s676] sm:$0xf]
        %v1590 = vld [vmem:[%s676 + $0x4] sm:$0xf]
        %v1591 = vld [vmem:[%s676 + $0x8] sm:$0xf]
        %v1592 = vld [vmem:[%s676 + $0xc] sm:$0xf]
        %v1593 = vld [vmem:[%s684] sm:$0x1]
        %v1595 = vlaneseq
        %v1596 = vshrl.u32 %v1595, 7
        %v1597 = vsub.s32 0, %v1596
        %v1598 = vrot.slane %v1593, %v1597
        %v1604 = vunpack.c.l.b16 %v1589
        %v1605 = vunpack.c.l.b16 %v1590
        %v1606 = vunpack.c.l.b16 %v1591
        %v1607 = vunpack.c.l.b16 %v1592
        %v1608 = vpack.c.b16 %v1605, %v1604
        %v1609 = vpack.c.b16 %v1607, %v1606
        %v1613 = vsel %vm878, %v1588, 0
        %1615 = vmatprep.subr.bf16.mxu0 0
        %1616 = vmatpush1.bf16.msra.mxu0 %v1608
        %1617 = vmatprep.subr.bf16.mxu0 0
        %1618 = vmatpush1.bf16.msra.mxu0 %v1609
        %1619 = vmatprep.subr.bf16.mxu0 0
        %1620 = vmatpush1.bf16.msra.mxu0 0
        %1621 = vmatprep.subr.bf16.mxu0 0
        %1622 = vmatpush1.bf16.msra.mxu0 0
        %1623 = vmatprep.subr.bf16.mxu0 0
        %1624 = vmatpush1.bf16.msra.mxu0 0
        %1625 = vmatprep.subr.bf16.mxu0 0
        %1626 = vmatpush1.bf16.msra.mxu0 0
        %1627 = vmatprep.subr.bf16.mxu0 0
        %1628 = vmatpush1.bf16.msra.mxu0 0
        %1629 = vmatprep.subr.bf16.mxu0 0
        %1630 = vmatpush1.bf16.msra.mxu0 0
        %1631 = vmatprep.subr.bf16.mxu0 0
        %1632 = vmatpush1.bf16.msra.mxu0 0
        %1633 = vmatprep.subr.bf16.mxu0 0
        %1634 = vmatpush1.bf16.msra.mxu0 0
        %1635 = vmatprep.subr.bf16.mxu0 0
        %1636 = vmatpush1.bf16.msra.mxu0 0
        %1637 = vmatprep.subr.bf16.mxu0 0
        %1638 = vmatpush1.bf16.msra.mxu0 0
        %1639 = vmatprep.subr.bf16.mxu0 0
        %1640 = vmatpush1.bf16.msra.mxu0 0
        %1641 = vmatprep.subr.bf16.mxu0 0
        %1642 = vmatpush1.bf16.msra.mxu0 0
        %1643 = vmatprep.subr.bf16.mxu0 0
        %1644 = vmatpush1.bf16.msra.mxu0 0
        %1645 = vmatprep.subr.bf16.mxu0 0
        %1646 = vmatpush1.bf16.msra.mxu0 0
        %1647 = vmatprep.mubr.bf16.mxu0 0
        %1648 = vmatmul.mubr.bf16.gmra.mrb[0].mxu0 %v1613
        %v1649 = vpop.f32.mrb[0].mxu0
        %v1650 = vadd.f32 %v1598, %v1649
        %v1651 = vpop.f32.mrb[0].mxu0
        %v1652 = vpop.f32.mrb[0].mxu0
        %v1653 = vpop.f32.mrb[0].mxu0
        %1654 = vdwg.mxu0
        %v1655 = vmax.f32 %v1650, 0.0
        %v1656 = vpack.c.bf16 %v1655, %v1655
        %v1657 = vld [vmem:[%s818] sm:$0xf]
        %v1658 = vld [vmem:[%s818 + $0x4] sm:$0xf]
        %v1659 = vld [vmem:[%s818 + $0x8] sm:$0xf]
        %v1660 = vld [vmem:[%s818 + $0xc] sm:$0xf]
        %v1661 = vld [vmem:[%s818 + $0x10] sm:$0xf]
        %v1662 = vld [vmem:[%s818 + $0x14] sm:$0xf]
        %v1663 = vld [vmem:[%s818 + $0x18] sm:$0xf]
        %v1664 = vld [vmem:[%s818 + $0x1c] sm:$0xf]
        %v1665 = vld [vmem:[%s821] sm:$0x1]
        %v1667 = vlaneseq
        %v1668 = vshrl.u32 %v1667, 7
        %v1669 = vsub.s32 0, %v1668
        %v1670 = vrot.slane %v1665, %v1669
        %v1680 = vunpack.c.l.b16 %v1657
        %v1681 = vunpack.c.l.b16 %v1658
        %v1682 = vunpack.c.l.b16 %v1659
        %v1683 = vunpack.c.l.b16 %v1660
        %v1684 = vunpack.c.l.b16 %v1661
        %v1685 = vunpack.c.l.b16 %v1662
        %v1686 = vunpack.c.l.b16 %v1663
        %v1687 = vunpack.c.l.b16 %v1664
        %v1688 = vpack.c.b16 %v1681, %v1680
        %v1689 = vpack.c.b16 %v1683, %v1682
        %v1690 = vpack.c.b16 %v1685, %v1684
        %v1691 = vpack.c.b16 %v1687, %v1686
        %vm1696 = vcmask 523264
        %v1698 = vsel %vm1696, %v1656, 0
        %1700 = vmatprep.subr.bf16.mxu0 0
        %1701 = vmatpush1.bf16.msra.mxu0 %v1688
        %1702 = vmatprep.subr.bf16.mxu0 0
        %1703 = vmatpush1.bf16.msra.mxu0 %v1689
        %1704 = vmatprep.subr.bf16.mxu0 0
        %1705 = vmatpush1.bf16.msra.mxu0 %v1690
        %1706 = vmatprep.subr.bf16.mxu0 0
        %1707 = vmatpush1.bf16.msra.mxu0 %v1691
        %1708 = vmatprep.subr.bf16.mxu0 0
        %1709 = vmatpush1.bf16.msra.mxu0 0
        %1710 = vmatprep.subr.bf16.mxu0 0
        %1711 = vmatpush1.bf16.msra.mxu0 0
        %1712 = vmatprep.subr.bf16.mxu0 0
        %1713 = vmatpush1.bf16.msra.mxu0 0
        %1714 = vmatprep.subr.bf16.mxu0 0
        %1715 = vmatpush1.bf16.msra.mxu0 0
        %1716 = vmatprep.subr.bf16.mxu0 0
        %1717 = vmatpush1.bf16.msra.mxu0 0
        %1718 = vmatprep.subr.bf16.mxu0 0
        %1719 = vmatpush1.bf16.msra.mxu0 0
        %1720 = vmatprep.subr.bf16.mxu0 0
        %1721 = vmatpush1.bf16.msra.mxu0 0
        %1722 = vmatprep.subr.bf16.mxu0 0
        %1723 = vmatpush1.bf16.msra.mxu0 0
        %1724 = vmatprep.subr.bf16.mxu0 0
        %1725 = vmatpush1.bf16.msra.mxu0 0
        %1726 = vmatprep.subr.bf16.mxu0 0
        %1727 = vmatpush1.bf16.msra.mxu0 0
        %1728 = vmatprep.subr.bf16.mxu0 0
        %1729 = vmatpush1.bf16.msra.mxu0 0
        %1730 = vmatprep.subr.bf16.mxu0 0
        %1731 = vmatpush1.bf16.msra.mxu0 0
        %1732 = vmatprep.mubr.bf16.mxu0 0
        %1733 = vmatmul.mubr.bf16.gmra.mrb[0].mxu0 %v1698
        %v1734 = vpop.f32.mrb[0].mxu0
        %v1735 = vadd.f32 %v1670, %v1734
        %v1736 = vpop.f32.mrb[0].mxu0
        %v1737 = vpop.f32.mrb[0].mxu0
        %v1738 = vpop.f32.mrb[0].mxu0
        %1739 = vdwg.mxu0
        %v1740 = vadd.f32 %v1735, %v1587
        %v1741 = vld [vmem:[%s824] sm:$0x1]
        %v1742 = vld [vmem:[%s827] sm:$0x1]
        %v1743 = vsel %vm878, %v1740, 0.0
        %1744 = vadd.xlane.f32.xlu0 %v1743
        %v1745 = vpop.xlane.xlu0 %1744
        %v1746 = vmul.f32 %v1745, %v1563
        %v1747 = vsub.f32 %v1740, %v1746
        %v1748 = vmul.f32 %v1747, %v1747
        %v1749 = vsel %vm878, %v1748, 0.0
        %1750 = vadd.xlane.f32.xlu0 %v1749
        %v1751 = vpop.xlane.xlu0 %1750
        %v1752 = vmul.f32 %v1751, %v1563
        %v1753 = vadd.f32 %v1752, 1e-05
        %v1754 = vrsqrt.pop %v1753
        %v1755 = vmul.f32 %v1747, %v1754
        %v1757 = vlaneseq
        %v1758 = vshrl.u32 %v1757, 7
        %v1759 = vsub.s32 0, %v1758
        %v1760 = vrot.slane %v1741, %v1759
        %v1762 = vmul.f32 %v1755, %v1760
        %v1764 = vlaneseq
        %v1765 = vshrl.u32 %v1764, 7
        %v1766 = vsub.s32 0, %v1765
        %v1767 = vrot.slane %v1742, %v1766
        %v1769 = vadd.f32 %v1762, %v1767
        %1770 = vst.msk [vmem:[#allocation2] sm:$0xff] %vm878, %v1769
        %p1771 = scmp.eq.s32.totalorder %s44, 1
        // Predicated region
        $region101: #{tpu_custom_call.1} parent=75 // pred_check
          %p1772 = pneg %p1771
        $region102: #{tpu_custom_call.1} parent=75 // pred_check_branch
          %1774 = sbr.rel (%p1772) target = $region104
        $region103: #{tpu_custom_call.1} parent=75 // pred_region
          %1775 = vst.msk [vmem:[%s781] sm:$0xff] %vm878, %v1769
        $region104: #{tpu_custom_call.1} parent=75 // pred_fallthru
          _
        %s1776 = sand.u32 %s423, 1
        %s1777 = scalar_lea.sflag [#allocation5], %s1776
        %s1778 = sand.u32 %s423, 1
        %s1779 = smul.addr %s1778, 8
        %s1780 = scalar_lea.vmem [#allocation12], %s1779
        %p1781 = scmp.lt.s32.totalorder %s44, 1
        %s1782 = scalar_select %p1781, %s44, 1
        %p1783 = scmp.lt.s32.totalorder %s43, 1
        %s1784 = scalar_select %p1783, %s43, 1
        %s1785 = smul.addr %s1784, 4
        %s1786 = smul.addr %s1782, 8
        %s1787 = sadd.s32 %s1785, %s1786
        %s1788 = smul.addr %s1787, 8
        %s1789 = scalar_lea.vmem %s15, %s1788
        // Predicated region
        $region105: #{tpu_custom_call.1} parent=75 // pred_check
          %p1790 = pneg %p433
        $region106: #{tpu_custom_call.1} parent=75 // pred_check_branch
          %1792 = sbr.rel (%p1790) target = $region108
        $region107: #{tpu_custom_call.1} parent=75 // pred_region
          %s1794 = ssub.s32 128, 128
          %1795 = vsyncadd %s1777, %s1794
          %s1796 = smul.addr %s43, 128
          %s1797 = scalar_lea.hbm %s14, %s1796
          %s1799 = sshll.u32 %s1780, 4
          %s1800 = int_to_ptr.vmem [resolvable:$true] %s1799
          %1802 = dma.vmem_to_hbm [thread:$0]  %s1800, 128, %s1797, %s1777
        $region108: #{tpu_custom_call.1} parent=75 // pred_fallthru
          _
        // Predicated region
        $region109: #{tpu_custom_call.1} parent=75 // pred_check
          %p1803 = pneg %p461
        $region110: #{tpu_custom_call.1} parent=75 // pred_check_branch
          %1805 = sbr.rel (%p1803) target = $region112
        $region111: #{tpu_custom_call.1} parent=75 // pred_region
          _
        $region112: #{tpu_custom_call.1} parent=75 // pred_fallthru
          _
      $region76: #{tpu_custom_call.1} parent=5 // pred_fallthru
        _
      %p1806 = scmp.le.s32.totalorder 2, %s34
      // Predicated region
      $region113: #{tpu_custom_call.1} parent=5 // pred_check
        %p1807 = pneg %p1806
      $region114: #{tpu_custom_call.1} parent=5 // pred_check_branch
        %1809 = sbr.rel (%p1807) target = $region116
      $region115: #{tpu_custom_call.1} parent=5 // pred_region
        %s1810 = ssub.s32 %s34, 2
        // Predicated region
        $region117: #{tpu_custom_call.1} parent=115 // pred_check
          %p1811 = pneg %p439
        $region118: #{tpu_custom_call.1} parent=115 // pred_check_branch
          %1813 = sbr.rel (%p1811) target = $region120
        $region119: #{tpu_custom_call.1} parent=115 // pred_region
          %s1814 = sand.u32 %s424, 1
          %s1815 = scalar_lea.sflag [#allocation5], %s1814
          %s1816 = sand.u32 %s424, 1
          %s1817 = smul.addr %s1816, 8
          %s1818 = scalar_lea.vmem [#allocation12], %s1817
          %1819 = dma.done %s1815, 128
        $region120: #{tpu_custom_call.1} parent=115 // pred_fallthru
          _
        // Predicated region
        $region121: #{tpu_custom_call.1} parent=115 // pred_check
          %p1820 = pneg %p467
        $region122: #{tpu_custom_call.1} parent=115 // pred_check_branch
          %1822 = sbr.rel (%p1820) target = $region124
        $region123: #{tpu_custom_call.1} parent=115 // pred_region
          %p1823 = scmp.lt.s32.totalorder %s46, 1
          %s1824 = scalar_select %p1823, %s46, 1
          %p1825 = scmp.lt.s32.totalorder %s45, 1
          %s1826 = scalar_select %p1825, %s45, 1
          %s1827 = smul.addr %s1826, 4
          %s1828 = smul.addr %s1824, 8
          %s1829 = sadd.s32 %s1827, %s1828
          %s1830 = smul.addr %s1829, 8
          %s1831 = scalar_lea.vmem %s15, %s1830
        $region124: #{tpu_custom_call.1} parent=115 // pred_fallthru
          _
      $region116: #{tpu_custom_call.1} parent=5 // pred_fallthru
        _
    $region6: #{tpu_custom_call.1} parent=1 // loop_footer
      %s38 = sadd.s32 1, %s34
    $region7: #{tpu_custom_call.1} parent=1 // loop_footer_branch
      %33 = sbr.rel target = $region3
    $region8: #{tpu_custom_call.1} parent=1 // loop_exit
      _
    %1832 = vsyncpa [#allocation4], 1
    %s1833 = scalar_lea.sflag [#allocation4], 1
    %1834 = vsyncpa %s1833, 1
    %1835 = vsyncpa [#allocation7], 1
    %s1836 = scalar_lea.sflag [#allocation7], 1
    %1837 = vsyncpa %s1836, 1
    %1838 = vsyncpa [#allocation10], 1
    %s1839 = scalar_lea.sflag [#allocation10], 1
    %1840 = vsyncpa %s1839, 1
    %1841 = vsyncpa [#allocation5], 1
    %s1842 = scalar_lea.sflag [#allocation5], 1
    %1843 = vsyncpa %s1842, 1

</llo_original>
